<compile_context>
chip_gen: v6e
topology: v6e:2x2x1
jax: 0.10.0
libtpu: 0.0.40
codegen_flags: <defaults>
</compile_context>

<pallas_src>
import numpy as np

import jax
import jax.numpy as jnp
from jax.experimental import pallas as pl
from jax.experimental.pallas import tpu as pltpu  # noqa: F401  (TPU backend)

EPS = 1e-5


# ----------------------------------------------------------------------------
# In-kernel helpers
# ----------------------------------------------------------------------------
def _bn_stats(y):
    """Training-mode BatchNorm stats over the lane axis (all positions), 1-pass."""
    m = y.shape[1]
    inv_m = 1.0 / m
    mean = jnp.sum(y, axis=1, keepdims=True) * inv_m
    var = jnp.sum(y * y, axis=1, keepdims=True) * inv_m - mean * mean
    var = jnp.maximum(var, 0.0)                      # guard fp round-off
    return mean, jax.lax.rsqrt(var + EPS)


def _pool4(y, blk):
    """Max over the 4 contiguous pool-corner lane blocks of width `blk`."""
    return jnp.maximum(jnp.maximum(y[:, 0:blk], y[:, blk:2 * blk]),
                       jnp.maximum(y[:, 2 * blk:3 * blk], y[:, 3 * blk:4 * blk]))


# ----------------------------------------------------------------------------
# Fused whole-network kernel (closure over static geometry)
# ----------------------------------------------------------------------------
def _make_kernel(n_batch, n_valid2, n_pos, tap):
    f32 = jnp.float32
    bf16 = jnp.bfloat16

    def kernel(a1_ref, w1t_ref, g2w_ref, w2t_ref,
               w0t_ref, w1f_ref, w2f_ref, bias_ref, out_ref):
        c1 = w1t_ref.shape[0]
        c2 = w2t_ref.shape[1]
        d0 = w0t_ref.shape[1]
        d1 = w1f_ref.shape[0]
        d2 = w2f_ref.shape[0]
        n_tap = w2t_ref.shape[0]

        # --- packed skinny f32 operands (one DMA instead of six) -------------
        b1c = bias_ref[0:c1, 0:1]
        b2c = bias_ref[0:c2, 1:2]
        b0 = bias_ref[0:d0, 2:3]
        b1f = bias_ref[0:d1, 3:4]
        b2f = bias_ref[0:d2, 4:5]
        sm = bias_ref[0:d2, 5:6]

        # --- conv1 + bias + ReLU (transposed GEMM: channels x positions) -----
        y1 = jnp.dot(w1t_ref[...], a1_ref[...], preferred_element_type=f32)
        y1 = jnp.maximum(y1 + b1c, 0.0)
        # BN2d stats over all N*Ho*Wo positions; MaxPool2d(2,2) = max of the 4
        # corner blocks; normalization applied after the max.
        mean1, inv1 = _bn_stats(y1)
        p1 = ((_pool4(y1, y1.shape[1] // 4) - mean1) * inv1).astype(bf16)

        # --- conv2: ONE wide gather matmul + 9 chained weight matmuls --------
        # g[:, t*tap : t*tap+n_valid2] = p1 gathered for tap t (lane-aligned).
        g = jnp.dot(p1, g2w_ref[...], preferred_element_type=f32).astype(bf16)
        y2 = jnp.dot(w2t_ref[0], g[:, 0:tap], preferred_element_type=f32)
        for t in range(1, n_tap):
            y2 = y2 + jnp.dot(w2t_ref[t], g[:, t * tap:(t + 1) * tap],
                              preferred_element_type=f32)
        y2 = y2[:, 0:n_valid2]                       # drop zero padding lanes
        y2 = jnp.maximum(y2 + b2c, 0.0)
        # BN stats include the floor-dropped columns (they feed stats, not pool)
        mean2, inv2 = _bn_stats(y2)
        q = ((_pool4(y2, n_pos * n_batch) - mean2) * inv2).astype(bf16)

        # --- FC layer 0: NCHW flatten folded into a per-position weight split
        h0 = jnp.dot(w0t_ref[0], q[:, 0:n_batch], preferred_element_type=f32)
        for j in range(1, n_pos):
            h0 = h0 + jnp.dot(w0t_ref[j], q[:, j * n_batch:(j + 1) * n_batch],
                              preferred_element_type=f32)
        h0 = jnp.maximum(h0 + b0, 0.0)
        m0, i0 = _bn_stats(h0)
        h0 = ((h0 - m0) * i0).astype(bf16)

        # --- FC layer 1 (block-diagonal across branches) + ReLU + BN1d -------
        h1 = jnp.dot(w1f_ref[...], h0, preferred_element_type=f32)
        h1 = jnp.maximum(h1 + b1f, 0.0)
        m1, i1 = _bn_stats(h1)
        h1 = ((h1 - m1) * i1).astype(bf16)

        # --- FC layer 2 (block-diagonal) + selective Sigmoid ------------------
        y = jnp.dot(w2f_ref[...], h1, preferred_element_type=f32) + b2f
        out_ref[...] = jnp.where(sm > 0.5, jax.nn.sigmoid(y), y)

    return kernel


# ----------------------------------------------------------------------------
# Weight / index-table packing for the fused kernel
# ----------------------------------------------------------------------------
def prepare_operands(params, image_shape, batch):
    c_in, h, w = image_shape
    convs = params["convs"]
    assert len(convs) == 2, "fused kernel is specialized to two conv stages"
    (w1, b1), (w2, b2) = convs
    c1, c2 = w1.shape[-1], w2.shape[-1]

    ho1, wo1 = h - 2, w - 2
    assert ho1 % 2 == 0 and wo1 % 2 == 0, "conv1 output must be even"
    hp1, wp1 = ho1 // 2, wo1 // 2
    ho2, wo2 = hp1 - 2, wp1 - 2
    hp2, wp2 = ho2 // 2, wo2 // 2
    n_pos = hp2 * wp2
    n_valid2 = batch * ho2 * wo2
    tap = ((n_valid2 + 127) // 128) * 128            # lane-tile aligned blocks

    # --- conv1 im2col flat-index table (single XLA gather in the wrapper) ----
    # rows: (kh, kw, ci) with ci minor; cols: (pool corner dh,dw | n, hp, wp)
    kh, kw, ci = [a.reshape(-1, 1) for a in np.meshgrid(
        np.arange(3), np.arange(3), np.arange(c_in), indexing="ij")]
    dh, dw, nn, hp, wp = [a.reshape(1, -1) for a in np.meshgrid(
        np.arange(2), np.arange(2), np.arange(batch),
        np.arange(hp1), np.arange(wp1), indexing="ij")]
    a1_idx = (((nn * c_in + ci) * h + (dh + kh + 2 * hp)) * w
              + (dw + kw + 2 * wp)).astype(np.int32)          # (9*Cin, 4*N*hp1*wp1)

    # --- conv weights transposed for (channels x positions) GEMMs ------------
    w1t = jnp.asarray(np.asarray(w1).reshape(9 * c_in, c1).T, jnp.bfloat16)
    w2t = jnp.asarray(np.stack([np.asarray(w2)[kh_, kw_].T
                                for kh_ in range(3) for kw_ in range(3)]),
                      jnp.bfloat16)                            # (9, C2, C1)

    # --- conv2 output column order: 4 pool corners x (hp2, wp2) x n first,
    #     then the positions dropped by MaxPool's floor (feed BN stats only).
    coords = []
    for dh_ in (0, 1):
        for dw_ in (0, 1):
            for hp_ in range(hp2):
                for wp_ in range(wp2):
                    for n_ in range(batch):
                        coords.append((n_, 2 * hp_ + dh_, 2 * wp_ + dw_))
    for n_ in range(batch):
        for ho_ in range(ho2):
            for wo_ in range(wo2):
                if ho_ >= 2 * hp2 or wo_ >= 2 * wp2:
                    coords.append((n_, ho_, wo_))
    assert len(coords) == n_valid2

    # ONE wide 0/1 lane-selection matrix: tap t occupies lanes [t*tap, t*tap+n_valid2)
    g2w = np.zeros((batch * hp1 * wp1, 9 * tap), np.float32)
    for t in range(9):
        kh_, kw_ = divmod(t, 3)
        for s, (n_, ho_, wo_) in enumerate(coords):
            g2w[n_ * hp1 * wp1 + (ho_ + kh_) * wp1 + (wo_ + kw_), t * tap + s] = 1.0
    g2w = jnp.asarray(g2w, jnp.bfloat16)

    # --- FC branches: concat outputs (layer 0) / block-diagonal (layers 1, 2)
    branches = [params["branch1"], params["branch2"],
                params["branch3"], params["branch4"]]
    sig = [True, False, False, True]                 # Sigmoid on branch1/branch4
    d0s = [np.asarray(br[0][0]).shape[1] for br in branches]
    d1s = [np.asarray(br[1][0]).shape[1] for br in branches]
    d2s = [np.asarray(br[2][0]).shape[1] for br in branches]
    d0_t, d1_t, d2_t = sum(d0s), sum(d1s), sum(d2s)

    # Layer 0: fold torch NCHW flatten (m = c*n_pos + j) into a per-j split
    w0t = np.zeros((n_pos, d0_t, c2), np.float32)
    b0v = np.zeros((d0_t,), np.float32)
    r = 0
    for br, d in zip(branches, d0s):
        w0b, b0b = br[0]
        w0r = np.asarray(w0b).reshape(c2, n_pos, d)
        for j in range(n_pos):
            w0t[j, r:r + d, :] = w0r[:, j, :].T
        b0v[r:r + d] = np.asarray(b0b)
        r += d

    w1f = np.zeros((d1_t, d0_t), np.float32)
    b1v = np.zeros((d1_t,), np.float32)
    r = c = 0
    for br, dr, dc in zip(branches, d1s, d0s):
        w1b, b1b = br[1]
        w1f[r:r + dr, c:c + dc] = np.asarray(w1b).T
        b1v[r:r + dr] = np.asarray(b1b)
        r += dr
        c += dc

    w2f = np.zeros((d2_t, d1_t), np.float32)
    b2v = np.zeros((d2_t,), np.float32)
    smv = np.zeros((d2_t,), np.float32)
    r = c = 0
    for br, dr, dc, s in zip(branches, d2s, d1s, sig):
        w2b, b2b = br[2]
        w2f[r:r + dr, c:c + dc] = np.asarray(w2b).T
        b2v[r:r + dr] = np.asarray(b2b)
        if s:
            smv[r:r + dr] = 1.0
        r += dr
        c += dc

    # --- pack all skinny f32 vectors into ONE operand (one DMA) --------------
    # columns: [conv1 bias, conv2 bias, fc0 bias, fc1 bias, fc2 bias, sig mask, 0, 0]
    max_d = max(c1, c2, d0_t, d1_t, d2_t)
    bias_pack = np.zeros((max_d, 8), np.float32)
    bias_pack[:c1, 0] = np.asarray(b1)
    bias_pack[:c2, 1] = np.asarray(b2)
    bias_pack[:d0_t, 2] = b0v
    bias_pack[:d1_t, 3] = b1v
    bias_pack[:d2_t, 4] = b2v
    bias_pack[:d2_t, 5] = smv

    ops = dict(
        a1_idx=jnp.asarray(a1_idx),
        w1t=w1t, g2w=g2w, w2t=w2t,
        w0t=jnp.asarray(w0t, jnp.bfloat16),
        w1f=jnp.asarray(w1f, jnp.bfloat16),
        w2f=jnp.asarray(w2f, jnp.bfloat16),
        bias=jnp.asarray(bias_pack),
    )
    geom = dict(d2_t=d2_t, n_branch2_out=d2s[1],
                n_valid2=n_valid2, n_pos=n_pos, tap=tap)
    return ops, geom


def make_forward(ops, geom, batch):
    kernel = _make_kernel(batch, geom["n_valid2"], geom["n_pos"], geom["tap"])
    call = pl.pallas_call(
        kernel,
        out_shape=jax.ShapeDtypeStruct((geom["d2_t"], batch), jnp.float32),
    )
    a1_idx = ops["a1_idx"]
    nv = geom["n_branch2_out"]

    def forward(x_nchw):
        # Single XLA gather replaces the old 36-op slice/transpose/concat prologue
        a1 = jnp.take(x_nchw.reshape(-1), a1_idx, axis=0).astype(jnp.bfloat16)
        out = call(a1, ops["w1t"], ops["g2w"], ops["w2t"],
                   ops["w0t"], ops["w1f"], ops["w2f"], ops["bias"])
        o = out.T                                    # (N, 3 + n_volumes)
        c = o[:, 0:1]
        v = o[:, 1:1 + nv]
        age = o[:, 1 + nv:2 + nv]
        sex = o[:, 2 + nv:3 + nv]
        return c, v, age, sex

    return forward


# ----------------------------------------------------------------------------
# Deterministic parameter construction (synthetic, mirrors __init__ shapes)
# ----------------------------------------------------------------------------
def conv_out(hw, k, stride=1):
    return ((hw[0] - (k - 1) - 1) // stride + 1,
            (hw[1] - (k - 1) - 1) // stride + 1)


def init_params(key, image_shape, convolutions, n_volumes):
    c_in, h, w = image_shape
    hw = (h, w)
    params = {"convs": []}
    for c_out in convolutions:
        key, k1, k2 = jax.random.split(key, 3)
        params["convs"].append(
            (jax.random.normal(k1, (3, 3, c_in, c_out), jnp.float32) * 0.1,
             jax.random.normal(k2, (c_out,), jnp.float32) * 0.1))
        hw = conv_out(hw, 3)
        hw = conv_out(hw, 2, stride=2)
        c_in = c_out
    feat = hw[0] * hw[1] * convolutions[-1]

    def mlp(key, dims):
        layers = []
        for din, dout in zip(dims[:-1], dims[1:]):
            key, k1, k2 = jax.random.split(key, 3)
            layers.append(
                (jax.random.normal(k1, (din, dout), jnp.float32) * 0.1,
                 jax.random.normal(k2, (dout,), jnp.float32) * 0.1))
        return key, layers

    d1, d2 = 32, 16
    key, params["branch1"] = mlp(key, (feat, d1, d2, 1))
    key, params["branch2"] = mlp(key, (feat, 4 * n_volumes, 2 * n_volumes, n_volumes))
    key, params["branch3"] = mlp(key, (feat, d1, d2, 1))
    key, params["branch4"] = mlp(key, (feat, d1, d2, 1))
    return params, feat


if __name__ == "__main__":
    key = jax.random.PRNGKey(0)
    image_shape = (4, 16, 16)       # sample['image'].shape -> (C, H, W)
    convolutions = (8, 16)
    n_volumes = 4                   # np.prod(sample['volumes'].shape)
    batch = 2

    key, kx = jax.random.split(key)
    x = jax.random.normal(kx, (batch,) + image_shape, jnp.float32)  # NCHW

    params, feat = init_params(key, image_shape, convolutions, n_volumes)
    ops, geom = prepare_operands(params, image_shape, batch)

    fwd = jax.jit(make_forward(ops, geom, batch))
    c, v, age, sex = fwd(x)
    jax.block_until_ready((c, v, age, sex))

    assert c.shape == (batch, 1)
    assert v.shape == (batch, n_volumes)
    assert age.shape == (batch, 1)
    assert sex.shape == (batch, 1)
    print("KERNEL_OK")
</pallas_src>

<mosaic_0001>
module attributes {stable_mosaic.version = 11 : i64} {
  func.func @kernel(%arg0: memref<36x392xbf16, #tpu.memory_space<vmem>>, %arg1: memref<8x36xbf16, #tpu.memory_space<vmem>>, %arg2: memref<98x1152xbf16, #tpu.memory_space<vmem>>, %arg3: memref<9x16x8xbf16, #tpu.memory_space<vmem>>, %arg4: memref<4x112x16xbf16, #tpu.memory_space<vmem>>, %arg5: memref<56x112xbf16, #tpu.memory_space<vmem>>, %arg6: memref<7x56xbf16, #tpu.memory_space<vmem>>, %arg7: memref<112x8xf32, #tpu.memory_space<vmem>>, %arg8: memref<7x2xf32, #tpu.memory_space<vmem>>) attributes {dimension_semantics = [], scalar_prefetch = 0 : i64, scratch_operands = 0 : i64, tpu.core_type = #tpu.core_type<tc>} {
    %c0 = arith.constant 0 : index
    %c0_0 = arith.constant 0 : index
    %0 = vector.load %arg7[%c0, %c0_0] : memref<112x8xf32, #tpu.memory_space<vmem>>, vector<8x1xf32>
    %c0_1 = arith.constant 0 : index
    %c1 = arith.constant 1 : index
    %1 = vector.load %arg7[%c0_1, %c1] : memref<112x8xf32, #tpu.memory_space<vmem>>, vector<16x1xf32>
    %c0_2 = arith.constant 0 : index
    %c2 = arith.constant 2 : index
    %2 = vector.load %arg7[%c0_2, %c2] : memref<112x8xf32, #tpu.memory_space<vmem>>, vector<112x1xf32>
    %c0_3 = arith.constant 0 : index
    %c3 = arith.constant 3 : index
    %3 = vector.load %arg7[%c0_3, %c3] : memref<112x8xf32, #tpu.memory_space<vmem>>, vector<56x1xf32>
    %c0_4 = arith.constant 0 : index
    %c4 = arith.constant 4 : index
    %4 = vector.load %arg7[%c0_4, %c4] : memref<112x8xf32, #tpu.memory_space<vmem>>, vector<7x1xf32>
    %c0_5 = arith.constant 0 : index
    %c5 = arith.constant 5 : index
    %5 = vector.load %arg7[%c0_5, %c5] : memref<112x8xf32, #tpu.memory_space<vmem>>, vector<7x1xf32>
    %c0_6 = arith.constant 0 : index
    %c0_7 = arith.constant 0 : index
    %6 = vector.load %arg1[%c0_6, %c0_7] : memref<8x36xbf16, #tpu.memory_space<vmem>>, vector<8x36xbf16>
    %c0_8 = arith.constant 0 : index
    %c0_9 = arith.constant 0 : index
    %7 = vector.load %arg0[%c0_8, %c0_9] : memref<36x392xbf16, #tpu.memory_space<vmem>>, vector<36x392xbf16>
    %cst = arith.constant dense<0.000000e+00> : vector<8x392xf32>
    %8 = tpu.matmul %6, %7, %cst {dimension_numbers = #tpu.dot_dimension_numbers<[1], [0], [0], [1], [0, 0, 1, 1], [], []>} : vector<8x36xbf16>, vector<36x392xbf16>, vector<8x392xf32> -> vector<8x392xf32>
    %9 = vector.broadcast %0 : vector<8x1xf32> to vector<8x392xf32>
    %10 = arith.addf %8, %9 : vector<8x392xf32>
    %cst_10 = arith.constant 0.000000e+00 : f32
    %11 = vector.broadcast %cst_10 : f32 to vector<8x392xf32>
    %12 = arith.maximumf %10, %11 : vector<8x392xf32>
    %cst_11 = arith.constant dense<0.000000e+00> : vector<8xf32>
    %13 = vector.multi_reduction <add>, %12, %cst_11 [1] : vector<8x392xf32> to vector<8xf32>
    %14 = vector.shape_cast %13 : vector<8xf32> to vector<8x1xf32>
    %cst_12 = arith.constant 0.00255102036 : f32
    %15 = vector.broadcast %cst_12 : f32 to vector<8x1xf32>
    %16 = arith.mulf %14, %15 : vector<8x1xf32>
    %17 = arith.mulf %12, %12 : vector<8x392xf32>
    %cst_13 = arith.constant dense<0.000000e+00> : vector<8xf32>
    %18 = vector.multi_reduction <add>, %17, %cst_13 [1] : vector<8x392xf32> to vector<8xf32>
    %19 = vector.shape_cast %18 : vector<8xf32> to vector<8x1xf32>
    %cst_14 = arith.constant 0.00255102036 : f32
    %20 = vector.broadcast %cst_14 : f32 to vector<8x1xf32>
    %21 = arith.mulf %19, %20 : vector<8x1xf32>
    %22 = arith.mulf %16, %16 : vector<8x1xf32>
    %23 = arith.subf %21, %22 : vector<8x1xf32>
    %cst_15 = arith.constant 0.000000e+00 : f32
    %24 = vector.broadcast %cst_15 : f32 to vector<8x1xf32>
    %25 = arith.maximumf %23, %24 : vector<8x1xf32>
    %cst_16 = arith.constant 9.99999974E-6 : f32
    %26 = vector.broadcast %cst_16 : f32 to vector<8x1xf32>
    %27 = arith.addf %25, %26 : vector<8x1xf32>
    %28 = math.rsqrt %27 : vector<8x1xf32>
    %29 = vector.extract_strided_slice %12 {offsets = [0, 0], sizes = [8, 98], strides = [1, 1]} : vector<8x392xf32> to vector<8x98xf32>
    %30 = vector.extract_strided_slice %12 {offsets = [0, 98], sizes = [8, 98], strides = [1, 1]} : vector<8x392xf32> to vector<8x98xf32>
    %31 = arith.maximumf %29, %30 : vector<8x98xf32>
    %32 = vector.extract_strided_slice %12 {offsets = [0, 196], sizes = [8, 98], strides = [1, 1]} : vector<8x392xf32> to vector<8x98xf32>
    %33 = vector.extract_strided_slice %12 {offsets = [0, 294], sizes = [8, 98], strides = [1, 1]} : vector<8x392xf32> to vector<8x98xf32>
    %34 = arith.maximumf %32, %33 : vector<8x98xf32>
    %35 = arith.maximumf %31, %34 : vector<8x98xf32>
    %36 = vector.broadcast %16 : vector<8x1xf32> to vector<8x98xf32>
    %37 = arith.subf %35, %36 : vector<8x98xf32>
    %38 = vector.broadcast %28 : vector<8x1xf32> to vector<8x98xf32>
    %39 = arith.mulf %37, %38 : vector<8x98xf32>
    %40 = arith.truncf %39 : vector<8x98xf32> to vector<8x98xbf16>
    %c0_17 = arith.constant 0 : index
    %c0_18 = arith.constant 0 : index
    %41 = vector.load %arg2[%c0_17, %c0_18] : memref<98x1152xbf16, #tpu.memory_space<vmem>>, vector<98x1152xbf16>
    %cst_19 = arith.constant dense<0.000000e+00> : vector<8x1152xf32>
    %42 = tpu.matmul %40, %41, %cst_19 {dimension_numbers = #tpu.dot_dimension_numbers<[1], [0], [0], [1], [0, 0, 1, 1], [], []>} : vector<8x98xbf16>, vector<98x1152xbf16>, vector<8x1152xf32> -> vector<8x1152xf32>
    %43 = arith.truncf %42 : vector<8x1152xf32> to vector<8x1152xbf16>
    %c0_20 = arith.constant 0 : index
    %c0_21 = arith.constant 0 : index
    %c0_22 = arith.constant 0 : index
    %44 = vector.load %arg3[%c0_20, %c0_21, %c0_22] : memref<9x16x8xbf16, #tpu.memory_space<vmem>>, vector<1x16x8xbf16>
    %45 = vector.shape_cast %44 : vector<1x16x8xbf16> to vector<16x8xbf16>
    %46 = vector.extract_strided_slice %43 {offsets = [0, 0], sizes = [8, 128], strides = [1, 1]} : vector<8x1152xbf16> to vector<8x128xbf16>
    %cst_23 = arith.constant dense<0.000000e+00> : vector<16x128xf32>
    %47 = tpu.matmul %45, %46, %cst_23 {dimension_numbers = #tpu.dot_dimension_numbers<[1], [0], [0], [1], [0, 0, 1, 1], [], []>} : vector<16x8xbf16>, vector<8x128xbf16>, vector<16x128xf32> -> vector<16x128xf32>
    %c1_24 = arith.constant 1 : index
    %c0_25 = arith.constant 0 : index
    %c0_26 = arith.constant 0 : index
    %48 = vector.load %arg3[%c1_24, %c0_25, %c0_26] : memref<9x16x8xbf16, #tpu.memory_space<vmem>>, vector<1x16x8xbf16>
    %49 = vector.shape_cast %48 : vector<1x16x8xbf16> to vector<16x8xbf16>
    %50 = vector.extract_strided_slice %43 {offsets = [0, 128], sizes = [8, 128], strides = [1, 1]} : vector<8x1152xbf16> to vector<8x128xbf16>
    %cst_27 = arith.constant dense<0.000000e+00> : vector<16x128xf32>
    %51 = tpu.matmul %49, %50, %cst_27 {dimension_numbers = #tpu.dot_dimension_numbers<[1], [0], [0], [1], [0, 0, 1, 1], [], []>} : vector<16x8xbf16>, vector<8x128xbf16>, vector<16x128xf32> -> vector<16x128xf32>
    %52 = arith.addf %47, %51 : vector<16x128xf32>
    %c2_28 = arith.constant 2 : index
    %c0_29 = arith.constant 0 : index
    %c0_30 = arith.constant 0 : index
    %53 = vector.load %arg3[%c2_28, %c0_29, %c0_30] : memref<9x16x8xbf16, #tpu.memory_space<vmem>>, vector<1x16x8xbf16>
    %54 = vector.shape_cast %53 : vector<1x16x8xbf16> to vector<16x8xbf16>
    %55 = vector.extract_strided_slice %43 {offsets = [0, 256], sizes = [8, 128], strides = [1, 1]} : vector<8x1152xbf16> to vector<8x128xbf16>
    %cst_31 = arith.constant dense<0.000000e+00> : vector<16x128xf32>
    %56 = tpu.matmul %54, %55, %cst_31 {dimension_numbers = #tpu.dot_dimension_numbers<[1], [0], [0], [1], [0, 0, 1, 1], [], []>} : vector<16x8xbf16>, vector<8x128xbf16>, vector<16x128xf32> -> vector<16x128xf32>
    %57 = arith.addf %52, %56 : vector<16x128xf32>
    %c3_32 = arith.constant 3 : index
    %c0_33 = arith.constant 0 : index
    %c0_34 = arith.constant 0 : index
    %58 = vector.load %arg3[%c3_32, %c0_33, %c0_34] : memref<9x16x8xbf16, #tpu.memory_space<vmem>>, vector<1x16x8xbf16>
    %59 = vector.shape_cast %58 : vector<1x16x8xbf16> to vector<16x8xbf16>
    %60 = vector.extract_strided_slice %43 {offsets = [0, 384], sizes = [8, 128], strides = [1, 1]} : vector<8x1152xbf16> to vector<8x128xbf16>
    %cst_35 = arith.constant dense<0.000000e+00> : vector<16x128xf32>
    %61 = tpu.matmul %59, %60, %cst_35 {dimension_numbers = #tpu.dot_dimension_numbers<[1], [0], [0], [1], [0, 0, 1, 1], [], []>} : vector<16x8xbf16>, vector<8x128xbf16>, vector<16x128xf32> -> vector<16x128xf32>
    %62 = arith.addf %57, %61 : vector<16x128xf32>
    %c4_36 = arith.constant 4 : index
    %c0_37 = arith.constant 0 : index
    %c0_38 = arith.constant 0 : index
    %63 = vector.load %arg3[%c4_36, %c0_37, %c0_38] : memref<9x16x8xbf16, #tpu.memory_space<vmem>>, vector<1x16x8xbf16>
    %64 = vector.shape_cast %63 : vector<1x16x8xbf16> to vector<16x8xbf16>
    %65 = vector.extract_strided_slice %43 {offsets = [0, 512], sizes = [8, 128], strides = [1, 1]} : vector<8x1152xbf16> to vector<8x128xbf16>
    %cst_39 = arith.constant dense<0.000000e+00> : vector<16x128xf32>
    %66 = tpu.matmul %64, %65, %cst_39 {dimension_numbers = #tpu.dot_dimension_numbers<[1], [0], [0], [1], [0, 0, 1, 1], [], []>} : vector<16x8xbf16>, vector<8x128xbf16>, vector<16x128xf32> -> vector<16x128xf32>
    %67 = arith.addf %62, %66 : vector<16x128xf32>
    %c5_40 = arith.constant 5 : index
    %c0_41 = arith.constant 0 : index
    %c0_42 = arith.constant 0 : index
    %68 = vector.load %arg3[%c5_40, %c0_41, %c0_42] : memref<9x16x8xbf16, #tpu.memory_space<vmem>>, vector<1x16x8xbf16>
    %69 = vector.shape_cast %68 : vector<1x16x8xbf16> to vector<16x8xbf16>
    %70 = vector.extract_strided_slice %43 {offsets = [0, 640], sizes = [8, 128], strides = [1, 1]} : vector<8x1152xbf16> to vector<8x128xbf16>
    %cst_43 = arith.constant dense<0.000000e+00> : vector<16x128xf32>
    %71 = tpu.matmul %69, %70, %cst_43 {dimension_numbers = #tpu.dot_dimension_numbers<[1], [0], [0], [1], [0, 0, 1, 1], [], []>} : vector<16x8xbf16>, vector<8x128xbf16>, vector<16x128xf32> -> vector<16x128xf32>
    %72 = arith.addf %67, %71 : vector<16x128xf32>
    %c6 = arith.constant 6 : index
    %c0_44 = arith.constant 0 : index
    %c0_45 = arith.constant 0 : index
    %73 = vector.load %arg3[%c6, %c0_44, %c0_45] : memref<9x16x8xbf16, #tpu.memory_space<vmem>>, vector<1x16x8xbf16>
    %74 = vector.shape_cast %73 : vector<1x16x8xbf16> to vector<16x8xbf16>
    %75 = vector.extract_strided_slice %43 {offsets = [0, 768], sizes = [8, 128], strides = [1, 1]} : vector<8x1152xbf16> to vector<8x128xbf16>
    %cst_46 = arith.constant dense<0.000000e+00> : vector<16x128xf32>
    %76 = tpu.matmul %74, %75, %cst_46 {dimension_numbers = #tpu.dot_dimension_numbers<[1], [0], [0], [1], [0, 0, 1, 1], [], []>} : vector<16x8xbf16>, vector<8x128xbf16>, vector<16x128xf32> -> vector<16x128xf32>
    %77 = arith.addf %72, %76 : vector<16x128xf32>
    %c7 = arith.constant 7 : index
    %c0_47 = arith.constant 0 : index
    %c0_48 = arith.constant 0 : index
    %78 = vector.load %arg3[%c7, %c0_47, %c0_48] : memref<9x16x8xbf16, #tpu.memory_space<vmem>>, vector<1x16x8xbf16>
    %79 = vector.shape_cast %78 : vector<1x16x8xbf16> to vector<16x8xbf16>
    %80 = vector.extract_strided_slice %43 {offsets = [0, 896], sizes = [8, 128], strides = [1, 1]} : vector<8x1152xbf16> to vector<8x128xbf16>
    %cst_49 = arith.constant dense<0.000000e+00> : vector<16x128xf32>
    %81 = tpu.matmul %79, %80, %cst_49 {dimension_numbers = #tpu.dot_dimension_numbers<[1], [0], [0], [1], [0, 0, 1, 1], [], []>} : vector<16x8xbf16>, vector<8x128xbf16>, vector<16x128xf32> -> vector<16x128xf32>
    %82 = arith.addf %77, %81 : vector<16x128xf32>
    %c8 = arith.constant 8 : index
    %c0_50 = arith.constant 0 : index
    %c0_51 = arith.constant 0 : index
    %83 = vector.load %arg3[%c8, %c0_50, %c0_51] : memref<9x16x8xbf16, #tpu.memory_space<vmem>>, vector<1x16x8xbf16>
    %84 = vector.shape_cast %83 : vector<1x16x8xbf16> to vector<16x8xbf16>
    %85 = vector.extract_strided_slice %43 {offsets = [0, 1024], sizes = [8, 128], strides = [1, 1]} : vector<8x1152xbf16> to vector<8x128xbf16>
    %cst_52 = arith.constant dense<0.000000e+00> : vector<16x128xf32>
    %86 = tpu.matmul %84, %85, %cst_52 {dimension_numbers = #tpu.dot_dimension_numbers<[1], [0], [0], [1], [0, 0, 1, 1], [], []>} : vector<16x8xbf16>, vector<8x128xbf16>, vector<16x128xf32> -> vector<16x128xf32>
    %87 = arith.addf %82, %86 : vector<16x128xf32>
    %88 = vector.extract_strided_slice %87 {offsets = [0, 0], sizes = [16, 50], strides = [1, 1]} : vector<16x128xf32> to vector<16x50xf32>
    %89 = vector.broadcast %1 : vector<16x1xf32> to vector<16x50xf32>
    %90 = arith.addf %88, %89 : vector<16x50xf32>
    %cst_53 = arith.constant 0.000000e+00 : f32
    %91 = vector.broadcast %cst_53 : f32 to vector<16x50xf32>
    %92 = arith.maximumf %90, %91 : vector<16x50xf32>
    %cst_54 = arith.constant dense<0.000000e+00> : vector<16xf32>
    %93 = vector.multi_reduction <add>, %92, %cst_54 [1] : vector<16x50xf32> to vector<16xf32>
    %94 = vector.shape_cast %93 : vector<16xf32> to vector<16x1xf32>
    %cst_55 = arith.constant 2.000000e-02 : f32
    %95 = vector.broadcast %cst_55 : f32 to vector<16x1xf32>
    %96 = arith.mulf %94, %95 : vector<16x1xf32>
    %97 = arith.mulf %92, %92 : vector<16x50xf32>
    %cst_56 = arith.constant dense<0.000000e+00> : vector<16xf32>
    %98 = vector.multi_reduction <add>, %97, %cst_56 [1] : vector<16x50xf32> to vector<16xf32>
    %99 = vector.shape_cast %98 : vector<16xf32> to vector<16x1xf32>
    %cst_57 = arith.constant 2.000000e-02 : f32
    %100 = vector.broadcast %cst_57 : f32 to vector<16x1xf32>
    %101 = arith.mulf %99, %100 : vector<16x1xf32>
    %102 = arith.mulf %96, %96 : vector<16x1xf32>
    %103 = arith.subf %101, %102 : vector<16x1xf32>
    %cst_58 = arith.constant 0.000000e+00 : f32
    %104 = vector.broadcast %cst_58 : f32 to vector<16x1xf32>
    %105 = arith.maximumf %103, %104 : vector<16x1xf32>
    %cst_59 = arith.constant 9.99999974E-6 : f32
    %106 = vector.broadcast %cst_59 : f32 to vector<16x1xf32>
    %107 = arith.addf %105, %106 : vector<16x1xf32>
    %108 = math.rsqrt %107 : vector<16x1xf32>
    %109 = vector.extract_strided_slice %92 {offsets = [0, 0], sizes = [16, 8], strides = [1, 1]} : vector<16x50xf32> to vector<16x8xf32>
    %110 = vector.extract_strided_slice %92 {offsets = [0, 8], sizes = [16, 8], strides = [1, 1]} : vector<16x50xf32> to vector<16x8xf32>
    %111 = arith.maximumf %109, %110 : vector<16x8xf32>
    %112 = vector.extract_strided_slice %92 {offsets = [0, 16], sizes = [16, 8], strides = [1, 1]} : vector<16x50xf32> to vector<16x8xf32>
    %113 = vector.extract_strided_slice %92 {offsets = [0, 24], sizes = [16, 8], strides = [1, 1]} : vector<16x50xf32> to vector<16x8xf32>
    %114 = arith.maximumf %112, %113 : vector<16x8xf32>
    %115 = arith.maximumf %111, %114 : vector<16x8xf32>
    %116 = vector.broadcast %96 : vector<16x1xf32> to vector<16x8xf32>
    %117 = arith.subf %115, %116 : vector<16x8xf32>
    %118 = vector.broadcast %108 : vector<16x1xf32> to vector<16x8xf32>
    %119 = arith.mulf %117, %118 : vector<16x8xf32>
    %120 = arith.truncf %119 : vector<16x8xf32> to vector<16x8xbf16>
    %c0_60 = arith.constant 0 : index
    %c0_61 = arith.constant 0 : index
    %c0_62 = arith.constant 0 : index
    %121 = vector.load %arg4[%c0_60, %c0_61, %c0_62] : memref<4x112x16xbf16, #tpu.memory_space<vmem>>, vector<1x112x16xbf16>
    %122 = vector.shape_cast %121 : vector<1x112x16xbf16> to vector<112x16xbf16>
    %123 = vector.extract_strided_slice %120 {offsets = [0, 0], sizes = [16, 2], strides = [1, 1]} : vector<16x8xbf16> to vector<16x2xbf16>
    %cst_63 = arith.constant dense<0.000000e+00> : vector<112x2xf32>
    %124 = tpu.matmul %122, %123, %cst_63 {dimension_numbers = #tpu.dot_dimension_numbers<[1], [0], [0], [1], [0, 0, 1, 1], [], []>} : vector<112x16xbf16>, vector<16x2xbf16>, vector<112x2xf32> -> vector<112x2xf32>
    %c1_64 = arith.constant 1 : index
    %c0_65 = arith.constant 0 : index
    %c0_66 = arith.constant 0 : index
    %125 = vector.load %arg4[%c1_64, %c0_65, %c0_66] : memref<4x112x16xbf16, #tpu.memory_space<vmem>>, vector<1x112x16xbf16>
    %126 = vector.shape_cast %125 : vector<1x112x16xbf16> to vector<112x16xbf16>
    %127 = vector.extract_strided_slice %120 {offsets = [0, 2], sizes = [16, 2], strides = [1, 1]} : vector<16x8xbf16> to vector<16x2xbf16>
    %cst_67 = arith.constant dense<0.000000e+00> : vector<112x2xf32>
    %128 = tpu.matmul %126, %127, %cst_67 {dimension_numbers = #tpu.dot_dimension_numbers<[1], [0], [0], [1], [0, 0, 1, 1], [], []>} : vector<112x16xbf16>, vector<16x2xbf16>, vector<112x2xf32> -> vector<112x2xf32>
    %129 = arith.addf %124, %128 : vector<112x2xf32>
    %c2_68 = arith.constant 2 : index
    %c0_69 = arith.constant 0 : index
    %c0_70 = arith.constant 0 : index
    %130 = vector.load %arg4[%c2_68, %c0_69, %c0_70] : memref<4x112x16xbf16, #tpu.memory_space<vmem>>, vector<1x112x16xbf16>
    %131 = vector.shape_cast %130 : vector<1x112x16xbf16> to vector<112x16xbf16>
    %132 = vector.extract_strided_slice %120 {offsets = [0, 4], sizes = [16, 2], strides = [1, 1]} : vector<16x8xbf16> to vector<16x2xbf16>
    %cst_71 = arith.constant dense<0.000000e+00> : vector<112x2xf32>
    %133 = tpu.matmul %131, %132, %cst_71 {dimension_numbers = #tpu.dot_dimension_numbers<[1], [0], [0], [1], [0, 0, 1, 1], [], []>} : vector<112x16xbf16>, vector<16x2xbf16>, vector<112x2xf32> -> vector<112x2xf32>
    %134 = arith.addf %129, %133 : vector<112x2xf32>
    %c3_72 = arith.constant 3 : index
    %c0_73 = arith.constant 0 : index
    %c0_74 = arith.constant 0 : index
    %135 = vector.load %arg4[%c3_72, %c0_73, %c0_74] : memref<4x112x16xbf16, #tpu.memory_space<vmem>>, vector<1x112x16xbf16>
    %136 = vector.shape_cast %135 : vector<1x112x16xbf16> to vector<112x16xbf16>
    %137 = vector.extract_strided_slice %120 {offsets = [0, 6], sizes = [16, 2], strides = [1, 1]} : vector<16x8xbf16> to vector<16x2xbf16>
    %cst_75 = arith.constant dense<0.000000e+00> : vector<112x2xf32>
    %138 = tpu.matmul %136, %137, %cst_75 {dimension_numbers = #tpu.dot_dimension_numbers<[1], [0], [0], [1], [0, 0, 1, 1], [], []>} : vector<112x16xbf16>, vector<16x2xbf16>, vector<112x2xf32> -> vector<112x2xf32>
    %139 = arith.addf %134, %138 : vector<112x2xf32>
    %140 = vector.broadcast %2 : vector<112x1xf32> to vector<112x2xf32>
    %141 = arith.addf %139, %140 : vector<112x2xf32>
    %cst_76 = arith.constant 0.000000e+00 : f32
    %142 = vector.broadcast %cst_76 : f32 to vector<112x2xf32>
    %143 = arith.maximumf %141, %142 : vector<112x2xf32>
    %cst_77 = arith.constant dense<0.000000e+00> : vector<112xf32>
    %144 = vector.multi_reduction <add>, %143, %cst_77 [1] : vector<112x2xf32> to vector<112xf32>
    %145 = vector.shape_cast %144 : vector<112xf32> to vector<112x1xf32>
    %cst_78 = arith.constant 5.000000e-01 : f32
    %146 = vector.broadcast %cst_78 : f32 to vector<112x1xf32>
    %147 = arith.mulf %145, %146 : vector<112x1xf32>
    %148 = arith.mulf %143, %143 : vector<112x2xf32>
    %cst_79 = arith.constant dense<0.000000e+00> : vector<112xf32>
    %149 = vector.multi_reduction <add>, %148, %cst_79 [1] : vector<112x2xf32> to vector<112xf32>
    %150 = vector.shape_cast %149 : vector<112xf32> to vector<112x1xf32>
    %cst_80 = arith.constant 5.000000e-01 : f32
    %151 = vector.broadcast %cst_80 : f32 to vector<112x1xf32>
    %152 = arith.mulf %150, %151 : vector<112x1xf32>
    %153 = arith.mulf %147, %147 : vector<112x1xf32>
    %154 = arith.subf %152, %153 : vector<112x1xf32>
    %cst_81 = arith.constant 0.000000e+00 : f32
    %155 = vector.broadcast %cst_81 : f32 to vector<112x1xf32>
    %156 = arith.maximumf %154, %155 : vector<112x1xf32>
    %cst_82 = arith.constant 9.99999974E-6 : f32
    %157 = vector.broadcast %cst_82 : f32 to vector<112x1xf32>
    %158 = arith.addf %156, %157 : vector<112x1xf32>
    %159 = math.rsqrt %158 : vector<112x1xf32>
    %160 = vector.broadcast %147 : vector<112x1xf32> to vector<112x2xf32>
    %161 = arith.subf %143, %160 : vector<112x2xf32>
    %162 = vector.broadcast %159 : vector<112x1xf32> to vector<112x2xf32>
    %163 = arith.mulf %161, %162 : vector<112x2xf32>
    %164 = arith.truncf %163 : vector<112x2xf32> to vector<112x2xbf16>
    %c0_83 = arith.constant 0 : index
    %c0_84 = arith.constant 0 : index
    %165 = vector.load %arg5[%c0_83, %c0_84] : memref<56x112xbf16, #tpu.memory_space<vmem>>, vector<56x112xbf16>
    %cst_85 = arith.constant dense<0.000000e+00> : vector<56x2xf32>
    %166 = tpu.matmul %165, %164, %cst_85 {dimension_numbers = #tpu.dot_dimension_numbers<[1], [0], [0], [1], [0, 0, 1, 1], [], []>} : vector<56x112xbf16>, vector<112x2xbf16>, vector<56x2xf32> -> vector<56x2xf32>
    %167 = vector.broadcast %3 : vector<56x1xf32> to vector<56x2xf32>
    %168 = arith.addf %166, %167 : vector<56x2xf32>
    %cst_86 = arith.constant 0.000000e+00 : f32
    %169 = vector.broadcast %cst_86 : f32 to vector<56x2xf32>
    %170 = arith.maximumf %168, %169 : vector<56x2xf32>
    %cst_87 = arith.constant dense<0.000000e+00> : vector<56xf32>
    %171 = vector.multi_reduction <add>, %170, %cst_87 [1] : vector<56x2xf32> to vector<56xf32>
    %172 = vector.shape_cast %171 : vector<56xf32> to vector<56x1xf32>
    %cst_88 = arith.constant 5.000000e-01 : f32
    %173 = vector.broadcast %cst_88 : f32 to vector<56x1xf32>
    %174 = arith.mulf %172, %173 : vector<56x1xf32>
    %175 = arith.mulf %170, %170 : vector<56x2xf32>
    %cst_89 = arith.constant dense<0.000000e+00> : vector<56xf32>
    %176 = vector.multi_reduction <add>, %175, %cst_89 [1] : vector<56x2xf32> to vector<56xf32>
    %177 = vector.shape_cast %176 : vector<56xf32> to vector<56x1xf32>
    %cst_90 = arith.constant 5.000000e-01 : f32
    %178 = vector.broadcast %cst_90 : f32 to vector<56x1xf32>
    %179 = arith.mulf %177, %178 : vector<56x1xf32>
    %180 = arith.mulf %174, %174 : vector<56x1xf32>
    %181 = arith.subf %179, %180 : vector<56x1xf32>
    %cst_91 = arith.constant 0.000000e+00 : f32
    %182 = vector.broadcast %cst_91 : f32 to vector<56x1xf32>
    %183 = arith.maximumf %181, %182 : vector<56x1xf32>
    %cst_92 = arith.constant 9.99999974E-6 : f32
    %184 = vector.broadcast %cst_92 : f32 to vector<56x1xf32>
    %185 = arith.addf %183, %184 : vector<56x1xf32>
    %186 = math.rsqrt %185 : vector<56x1xf32>
    %187 = vector.broadcast %174 : vector<56x1xf32> to vector<56x2xf32>
    %188 = arith.subf %170, %187 : vector<56x2xf32>
    %189 = vector.broadcast %186 : vector<56x1xf32> to vector<56x2xf32>
    %190 = arith.mulf %188, %189 : vector<56x2xf32>
    %191 = arith.truncf %190 : vector<56x2xf32> to vector<56x2xbf16>
    %c0_93 = arith.constant 0 : index
    %c0_94 = arith.constant 0 : index
    %192 = vector.load %arg6[%c0_93, %c0_94] : memref<7x56xbf16, #tpu.memory_space<vmem>>, vector<7x56xbf16>
    %cst_95 = arith.constant dense<0.000000e+00> : vector<7x2xf32>
    %193 = tpu.matmul %192, %191, %cst_95 {dimension_numbers = #tpu.dot_dimension_numbers<[1], [0], [0], [1], [0, 0, 1, 1], [], []>} : vector<7x56xbf16>, vector<56x2xbf16>, vector<7x2xf32> -> vector<7x2xf32>
    %194 = vector.broadcast %4 : vector<7x1xf32> to vector<7x2xf32>
    %195 = arith.addf %193, %194 : vector<7x2xf32>
    %cst_96 = arith.constant 5.000000e-01 : f32
    %196 = vector.broadcast %cst_96 : f32 to vector<7x1xf32>
    %197 = arith.cmpf ogt, %5, %196 : vector<7x1xf32>
    %198 = arith.negf %195 : vector<7x2xf32>
    %199 = math.exp %198 : vector<7x2xf32>
    %cst_97 = arith.constant 1.000000e+00 : f32
    %200 = vector.broadcast %cst_97 : f32 to vector<7x2xf32>
    %201 = arith.addf %200, %199 : vector<7x2xf32>
    %202 = arith.divf %200, %201 : vector<7x2xf32>
    %203 = vector.shape_cast %197 : vector<7x1xi1> to vector<7x1xi1>
    %204 = vector.broadcast %203 : vector<7x1xi1> to vector<7x2xi1>
    %205 = arith.select %204, %202, %195 : vector<7x2xi1>, vector<7x2xf32>
    %c0_98 = arith.constant 0 : index
    %c0_99 = arith.constant 0 : index
    %206 = vector.load %arg8[%c0_98, %c0_99] : memref<7x2xf32, #tpu.memory_space<vmem>>, vector<7x2xf32>
    tpu.vector_store %arg8[%c0_98, %c0_99], %205 {strides = array<i32>} : memref<7x2xf32, #tpu.memory_space<vmem>>, vector<7x2xf32>,
    return
  }
}

</mosaic_0001>

<llo_original>
// kernel: forward.1
$region0: #{forward.1}
  #allocation0 [shape = 'u32[]', space=smem, size = 0x4, offset = 0x4, fixed_abs, tag = 'smem constant byte address 0x4 - core index']
  #allocation1 [shape = 'u32[144,128]{1,0:T(1,128)}', space=vmem, size = 0x12000, scoped, tag = 'internal scratch']
  %s0 = inlined_call_operand.vmem [shape: bf16[36,392], index: 0, kind: input, shape index: {}]
  %s1 = inlined_call_operand.vmem [shape: bf16[8,36], index: 1, kind: input, shape index: {}]
  %s2 = inlined_call_operand.vmem [shape: bf16[98,1152], index: 2, kind: input, shape index: {}]
  %s3 = inlined_call_operand.vmem [shape: bf16[9,16,8], index: 3, kind: input, shape index: {}]
  %s4 = inlined_call_operand.vmem [shape: bf16[4,112,16], index: 4, kind: input, shape index: {}]
  %s5 = inlined_call_operand.vmem [shape: bf16[56,112], index: 5, kind: input, shape index: {}]
  %s6 = inlined_call_operand.vmem [shape: bf16[7,56], index: 6, kind: input, shape index: {}]
  %s7 = inlined_call_operand.vmem [shape: f32[112,8], index: 7, kind: input, shape index: {}]
  %s8 = inlined_call_operand.vmem [shape: f32[7,2], index: 8, kind: output, shape index: {}]
  %s9 = sld [smem:[#allocation0]]
  $region42: #{forward.1} parent=0
    _
  %s11 = ssub.s32 1, %s9
  %s12 = scalar_select 0, %s11, %s9
  // Predicated region
  $region2: #{forward.1} parent=0 // pred_check
    _
  $region3: #{forward.1} parent=0 // pred_check_branch
    %14 = sbr.rel (0) target = $region5
  $region4: #{forward.1} parent=0 // pred_region
    _
  $region5: #{forward.1} parent=0 // pred_fallthru
    _
  // Predicated region
  $region6: #{forward.1} parent=0 // pred_check
    _
  $region7: #{forward.1} parent=0 // pred_check_branch
    %16 = sbr.rel (0) target = $region9
  $region8: #{forward.1} parent=0 // pred_region
    _
  $region9: #{forward.1} parent=0 // pred_fallthru
    _
  // Predicated region
  $region10: #{forward.1} parent=0 // pred_check
    _
  $region11: #{forward.1} parent=0 // pred_check_branch
    %18 = sbr.rel (0) target = $region13
  $region12: #{forward.1} parent=0 // pred_region
    _
  $region13: #{forward.1} parent=0 // pred_fallthru
    _
  // Predicated region
  $region14: #{forward.1} parent=0 // pred_check
    _
  $region15: #{forward.1} parent=0 // pred_check_branch
    %20 = sbr.rel (0) target = $region17
  $region16: #{forward.1} parent=0 // pred_region
    _
  $region17: #{forward.1} parent=0 // pred_fallthru
    _
  // Predicated region
  $region18: #{forward.1} parent=0 // pred_check
    _
  $region19: #{forward.1} parent=0 // pred_check_branch
    %22 = sbr.rel (0) target = $region21
  $region20: #{forward.1} parent=0 // pred_region
    _
  $region21: #{forward.1} parent=0 // pred_fallthru
    _
  // Predicated region
  $region22: #{forward.1} parent=0 // pred_check
    _
  $region23: #{forward.1} parent=0 // pred_check_branch
    %24 = sbr.rel (0) target = $region25
  $region24: #{forward.1} parent=0 // pred_region
    _
  $region25: #{forward.1} parent=0 // pred_fallthru
    _
  // Predicated region
  $region26: #{forward.1} parent=0 // pred_check
    _
  $region27: #{forward.1} parent=0 // pred_check_branch
    %26 = sbr.rel (0) target = $region29
  $region28: #{forward.1} parent=0 // pred_region
    _
  $region29: #{forward.1} parent=0 // pred_fallthru
    _
  // Predicated region
  $region30: #{forward.1} parent=0 // pred_check
    _
  $region31: #{forward.1} parent=0 // pred_check_branch
    %28 = sbr.rel (0) target = $region33
  $region32: #{forward.1} parent=0 // pred_region
    _
  $region33: #{forward.1} parent=0 // pred_fallthru
    _
  %v30 = vld [vmem:[%s7] sm:$0xff]
  %v31 = vld [vmem:[%s7 + $0x8] sm:$0xff]
  %v32 = vld [vmem:[%s7 + $0x10] sm:$0xff]
  %v33 = vld [vmem:[%s7 + $0x18] sm:$0xff]
  %v34 = vld [vmem:[%s7 + $0x20] sm:$0xff]
  %v35 = vld [vmem:[%s7 + $0x28] sm:$0xff]
  %v36 = vld [vmem:[%s7 + $0x30] sm:$0xff]
  %v37 = vld [vmem:[%s7 + $0x38] sm:$0xff]
  %v38 = vld [vmem:[%s7 + $0x40] sm:$0xff]
  %v39 = vld [vmem:[%s7 + $0x48] sm:$0xff]
  %v40 = vld [vmem:[%s7 + $0x50] sm:$0xff]
  %v41 = vld [vmem:[%s7 + $0x58] sm:$0xff]
  %v42 = vld [vmem:[%s7 + $0x60] sm:$0xff]
  %v43 = vld [vmem:[%s7 + $0x68] sm:$0xff]
  %v44 = vld [vmem:[%s7] sm:$0x7f]
  %v45 = vld [vmem:[%s1] sm:$0xf]
  %v46 = vld [vmem:[%s0] sm:$0xff]
  %v47 = vld [vmem:[%s0 + $0x8] sm:$0xff]
  %v48 = vld [vmem:[%s0 + $0x10] sm:$0xff]
  %v49 = vld [vmem:[%s0 + $0x18] sm:$0xff]
  %v50 = vld [vmem:[%s0 + $0x20] sm:$0xff]
  %v51 = vld [vmem:[%s0 + $0x28] sm:$0xff]
  %v52 = vld [vmem:[%s0 + $0x30] sm:$0xff]
  %v53 = vld [vmem:[%s0 + $0x38] sm:$0xff]
  %v54 = vld [vmem:[%s0 + $0x40] sm:$0x33]
  %v55 = vld [vmem:[%s0 + $0x48] sm:$0x33]
  %57 = vset.pattern.permute.xlu0 0
  %58 = vperm.xlu0 %57, %v30
  %v59 = vpop.permute.xlu0 %58
  %v71 = vunpack.c.l.b16 %v46
  %v72 = vunpack.c.h.b16 %v46
  %v73 = vunpack.c.l.b16 %v47
  %v74 = vunpack.c.h.b16 %v47
  %v75 = vunpack.c.l.b16 %v48
  %v76 = vunpack.c.h.b16 %v48
  %v77 = vunpack.c.l.b16 %v49
  %v78 = vunpack.c.h.b16 %v49
  %v79 = vunpack.c.l.b16 %v50
  %v80 = vunpack.c.h.b16 %v50
  %v81 = vunpack.c.l.b16 %v51
  %v82 = vunpack.c.h.b16 %v51
  %v83 = vunpack.c.l.b16 %v52
  %v84 = vunpack.c.h.b16 %v52
  %v85 = vunpack.c.l.b16 %v53
  %v86 = vunpack.c.h.b16 %v53
  %v87 = vunpack.c.l.b16 %v54
  %v88 = vunpack.c.h.b16 %v54
  %v89 = vunpack.c.l.b16 %v55
  %v90 = vunpack.c.h.b16 %v55
  %v91 = vpack.c.b16 %v75, %v71
  %v92 = vpack.c.b16 %v76, %v72
  %v93 = vpack.c.b16 %v77, %v73
  %v94 = vpack.c.b16 %v78, %v74
  %v95 = vpack.c.b16 %v83, %v79
  %v96 = vpack.c.b16 %v84, %v80
  %v97 = vpack.c.b16 %v85, %v81
  %v98 = vpack.c.b16 %v86, %v82
  %v99 = vpack.c.b16 %v87, %v87
  %v100 = vpack.c.b16 %v88, %v88
  %v101 = vpack.c.b16 %v89, %v89
  %v102 = vpack.c.b16 %v90, %v90
  %vm111 = vcmask 293888
  %v113 = vsel %vm111, %v45, 0
  %vm115 = vcmask 1041408
  %v117 = vsel %vm115, %v99, 0
  %v120 = vsel %vm115, %v100, 0
  %v123 = vsel %vm115, %v101, 0
  %v126 = vsel %vm115, %v102, 0
  %128 = vmatprep.subr.bf16.mxu0 0
  %129 = vmatpush1.bf16.msra.mxu0 0
  %130 = vmatprep.subr.bf16.mxu0 0
  %131 = vmatpush1.bf16.msra.mxu0 0
  %132 = vmatprep.subr.bf16.mxu0 0
  %133 = vmatpush1.bf16.msra.mxu0 0
  %134 = vmatprep.subr.bf16.mxu0 0
  %135 = vmatpush1.bf16.msra.mxu0 0
  %136 = vmatprep.subr.bf16.mxu0 0
  %137 = vmatpush1.bf16.msra.mxu0 0
  %138 = vmatprep.subr.bf16.mxu0 %v120
  %139 = vmatpush1.bf16.msra.mxu0 %v117
  %140 = vmatprep.subr.bf16.mxu0 %v96
  %141 = vmatpush1.bf16.msra.mxu0 %v95
  %142 = vmatprep.subr.bf16.mxu0 %v92
  %143 = vmatpush1.bf16.msra.mxu0 %v91
  %144 = vmatprep.subr.bf16.mxu0 0
  %145 = vmatpush2.bf16.msra.mxu0 0
  %146 = vmatprep.subr.bf16.mxu0 0
  %147 = vmatpush2.bf16.msra.mxu0 0
  %148 = vmatprep.subr.bf16.mxu0 0
  %149 = vmatpush2.bf16.msra.mxu0 0
  %150 = vmatprep.subr.bf16.mxu0 0
  %151 = vmatpush2.bf16.msra.mxu0 0
  %152 = vmatprep.subr.bf16.mxu0 0
  %153 = vmatpush2.bf16.msra.mxu0 0
  %154 = vmatprep.subr.bf16.mxu0 0
  %155 = vmatpush2.bf16.msra.mxu0 0
  %156 = vmatprep.subr.bf16.mxu0 0
  %157 = vmatpush2.bf16.msra.mxu0 0
  %158 = vmatprep.subr.bf16.mxu0 0
  %159 = vmatpush2.bf16.msra.mxu0 0
  %160 = vmatprep.mubr.bf16.mxu0 0
  %161 = vmatmul.mubr.bf16.gmra.mxu0 %v113
  %v162 = vpop.f32.mrf.mxu0
  %v163 = vadd.f32 %v59, %v162
  %v164 = vpop.f32.mrf.mxu0
  %v165 = vadd.f32 %v59, %v164
  %v166 = vpop.f32.mrf.mxu0
  %v167 = vpop.f32.mrf.mxu0
  %168 = vdwg.mxu0
  %169 = vmatprep.subr.bf16.mxu0 0
  %170 = vmatpush1.bf16.msra.mxu0 0
  %171 = vmatprep.subr.bf16.mxu0 0
  %172 = vmatpush1.bf16.msra.mxu0 0
  %173 = vmatprep.subr.bf16.mxu0 0
  %174 = vmatpush1.bf16.msra.mxu0 0
  %175 = vmatprep.subr.bf16.mxu0 0
  %176 = vmatpush1.bf16.msra.mxu0 0
  %177 = vmatprep.subr.bf16.mxu0 0
  %178 = vmatpush1.bf16.msra.mxu0 0
  %179 = vmatprep.subr.bf16.mxu0 %v126
  %180 = vmatpush1.bf16.msra.mxu0 %v123
  %181 = vmatprep.subr.bf16.mxu0 %v98
  %182 = vmatpush1.bf16.msra.mxu0 %v97
  %183 = vmatprep.subr.bf16.mxu0 %v94
  %184 = vmatpush1.bf16.msra.mxu0 %v93
  %185 = vmatprep.subr.bf16.mxu0 0
  %186 = vmatpush2.bf16.msra.mxu0 0
  %187 = vmatprep.subr.bf16.mxu0 0
  %188 = vmatpush2.bf16.msra.mxu0 0
  %189 = vmatprep.subr.bf16.mxu0 0
  %190 = vmatpush2.bf16.msra.mxu0 0
  %191 = vmatprep.subr.bf16.mxu0 0
  %192 = vmatpush2.bf16.msra.mxu0 0
  %193 = vmatprep.subr.bf16.mxu0 0
  %194 = vmatpush2.bf16.msra.mxu0 0
  %195 = vmatprep.subr.bf16.mxu0 0
  %196 = vmatpush2.bf16.msra.mxu0 0
  %197 = vmatprep.subr.bf16.mxu0 0
  %198 = vmatpush2.bf16.msra.mxu0 0
  %199 = vmatprep.subr.bf16.mxu0 0
  %200 = vmatpush2.bf16.msra.mxu0 0
  %201 = vmatprep.mubr.bf16.mxu0 0
  %202 = vmatmul.mubr.bf16.gmra.mxu0 %v113
  %v203 = vpop.f32.mrf.mxu0
  %v204 = vadd.f32 %v59, %v203
  %v205 = vpop.f32.mrf.mxu0
  %v206 = vadd.f32 %v59, %v205
  %v207 = vpop.f32.mrf.mxu0
  %v208 = vpop.f32.mrf.mxu0
  %209 = vdwg.mxu0
  %v210 = vmax.f32 %v163, 0.0
  %v211 = vmax.f32 %v165, 0.0
  %v212 = vmax.f32 %v204, 0.0
  %v213 = vmax.f32 %v206, 0.0
  %v214 = vadd.f32 %v210, %v211
  %v215 = vadd.f32 %v214, %v212
  %vm216 = vcmask 64512
  %v217 = vsel %vm216, %v213, 0.0
  %v218 = vadd.f32 %v215, %v217
  %219 = vadd.xlane.f32.xlu0 %v218
  %v220 = vpop.xlane.xlu0 %219
  %v221 = vmul.f32 %v220, 0.0025510204
  %v222 = vmul.f32 %v210, %v210
  %v223 = vmul.f32 %v211, %v211
  %v224 = vmul.f32 %v212, %v212
  %v225 = vmul.f32 %v213, %v213
  %v226 = vadd.f32 %v222, %v223
  %v227 = vadd.f32 %v226, %v224
  %v228 = vsel %vm216, %v225, 0.0
  %v229 = vadd.f32 %v227, %v228
  %230 = vadd.xlane.f32.xlu0 %v229
  %v231 = vpop.xlane.xlu0 %230
  %v232 = vmul.f32 %v231, 0.0025510204
  %v233 = vmul.f32 %v221, %v221
  %v234 = vsub.f32 %v232, %v233
  %v235 = vmax.f32 %v234, 0.0
  %v236 = vadd.f32 %v235, 1e-05
  %v237 = vrsqrt.pop %v236
  %240 = vrot.lane.b32.xlu0 %v210, 30
  %v241 = vpop.permute.xlu0 %240
  %242 = vrot.lane.b32.xlu0 %v211, 30
  %v243 = vpop.permute.xlu0 %242
  %vm244 = vcmask 244736
  %v245 = vsel %vm244, %v241, %v243
  %v247 = vmax.f32 %v210, %v245
  %250 = vrot.lane.b32.xlu0 %v212, 30
  %v251 = vpop.permute.xlu0 %250
  %252 = vrot.lane.b32.xlu0 %v213, 30
  %v253 = vpop.permute.xlu0 %252
  %v254 = vsel %vm244, %v251, %v253
  %v257 = vmax.f32 %v211, %v251
  %v258 = vmax.f32 %v212, %v254
  %261 = vrot.lane.b32.xlu0 %v257, 60
  %v262 = vpop.permute.xlu0 %261
  %263 = vrot.lane.b32.xlu0 %v258, 60
  %v264 = vpop.permute.xlu0 %263
  %vm265 = vcmask 490496
  %v266 = vsel %vm265, %v262, %v264
  %v268 = vmax.f32 %v247, %v266
  %v269 = vsub.f32 %v268, %v221
  %v270 = vmul.f32 %v269, %v237
  %v271 = vpack.c.bf16 %v270, %v270
  %v272 = vld [vmem:[%s2] sm:$0xff]
  %v273 = vld [vmem:[%s2 + $0x8] sm:$0xff]
  %v274 = vld [vmem:[%s2 + $0x10] sm:$0xff]
  %v275 = vld [vmem:[%s2 + $0x18] sm:$0xff]
  %v276 = vld [vmem:[%s2 + $0x20] sm:$0xf]
  %v277 = vld [vmem:[%s2 + $0x24] sm:$0xff]
  %v278 = vld [vmem:[%s2 + $0x2c] sm:$0xff]
  %v279 = vld [vmem:[%s2 + $0x34] sm:$0xff]
  %v280 = vld [vmem:[%s2 + $0x3c] sm:$0xff]
  %v281 = vld [vmem:[%s2 + $0x44] sm:$0xf]
  %v282 = vld [vmem:[%s2 + $0x48] sm:$0xff]
  %v283 = vld [vmem:[%s2 + $0x50] sm:$0xff]
  %v284 = vld [vmem:[%s2 + $0x58] sm:$0xff]
  %v285 = vld [vmem:[%s2 + $0x60] sm:$0xff]
  %v286 = vld [vmem:[%s2 + $0x68] sm:$0xf]
  %v287 = vld [vmem:[%s2 + $0x6c] sm:$0xff]
  %v288 = vld [vmem:[%s2 + $0x74] sm:$0xff]
  %v289 = vld [vmem:[%s2 + $0x7c] sm:$0xff]
  %v290 = vld [vmem:[%s2 + $0x84] sm:$0xff]
  %v291 = vld [vmem:[%s2 + $0x8c] sm:$0xf]
  %v292 = vld [vmem:[%s2 + $0x90] sm:$0xff]
  %v293 = vld [vmem:[%s2 + $0x98] sm:$0xff]
  %v294 = vld [vmem:[%s2 + $0xa0] sm:$0xff]
  %v295 = vld [vmem:[%s2 + $0xa8] sm:$0xff]
  %v296 = vld [vmem:[%s2 + $0xb0] sm:$0xf]
  %v297 = vld [vmem:[%s2 + $0xb4] sm:$0xff]
  %v298 = vld [vmem:[%s2 + $0xbc] sm:$0xff]
  %v299 = vld [vmem:[%s2 + $0xc4] sm:$0xff]
  %v300 = vld [vmem:[%s2 + $0xcc] sm:$0xff]
  %v301 = vld [vmem:[%s2 + $0xd4] sm:$0xf]
  %v302 = vld [vmem:[%s2 + $0xd8] sm:$0xff]
  %v303 = vld [vmem:[%s2 + $0xe0] sm:$0xff]
  %v304 = vld [vmem:[%s2 + $0xe8] sm:$0xff]
  %v305 = vld [vmem:[%s2 + $0xf0] sm:$0xff]
  %v306 = vld [vmem:[%s2 + $0xf8] sm:$0xf]
  %v307 = vld [vmem:[%s2 + $0xfc] sm:$0xff]
  %v308 = vld [vmem:[%s2 + $0x104] sm:$0xff]
  %v309 = vld [vmem:[%s2 + $0x10c] sm:$0xff]
  %v310 = vld [vmem:[%s2 + $0x114] sm:$0xff]
  %v311 = vld [vmem:[%s2 + $0x11c] sm:$0xf]
  %v312 = vld [vmem:[%s2 + $0x120] sm:$0xff]
  %v313 = vld [vmem:[%s2 + $0x128] sm:$0xff]
  %v314 = vld [vmem:[%s2 + $0x130] sm:$0xff]
  %v315 = vld [vmem:[%s2 + $0x138] sm:$0xff]
  %v316 = vld [vmem:[%s2 + $0x140] sm:$0xf]
  %v317 = vld [vmem:[%s2 + $0x144] sm:$0xff]
  %v318 = vld [vmem:[%s2 + $0x14c] sm:$0xff]
  %v319 = vld [vmem:[%s2 + $0x154] sm:$0xff]
  %v320 = vld [vmem:[%s2 + $0x15c] sm:$0xff]
  %v321 = vld [vmem:[%s2 + $0x164] sm:$0xf]
  %v322 = vld [vmem:[%s2 + $0x168] sm:$0xff]
  %v323 = vld [vmem:[%s2 + $0x170] sm:$0xff]
  %v324 = vld [vmem:[%s2 + $0x178] sm:$0xff]
  %v325 = vld [vmem:[%s2 + $0x180] sm:$0xff]
  %v326 = vld [vmem:[%s2 + $0x188] sm:$0xf]
  %v327 = vld [vmem:[%s2 + $0x18c] sm:$0xff]
  %v328 = vld [vmem:[%s2 + $0x194] sm:$0xff]
  %v329 = vld [vmem:[%s2 + $0x19c] sm:$0xff]
  %v330 = vld [vmem:[%s2 + $0x1a4] sm:$0xff]
  %v331 = vld [vmem:[%s2 + $0x1ac] sm:$0xf]
  %v332 = vld [vmem:[%s2 + $0x1b0] sm:$0x11]
  %v333 = vld [vmem:[%s2 + $0x1b8] sm:$0x11]
  %v334 = vld [vmem:[%s2 + $0x1c0] sm:$0x11]
  %v335 = vld [vmem:[%s2 + $0x1c8] sm:$0x11]
  %v336 = vld [vmem:[%s2 + $0x1d0] sm:$0x1]
  %v402 = vunpack.c.l.b16 %v272
  %v403 = vunpack.c.h.b16 %v272
  %v404 = vunpack.c.l.b16 %v273
  %v405 = vunpack.c.h.b16 %v273
  %v406 = vunpack.c.l.b16 %v274
  %v407 = vunpack.c.h.b16 %v274
  %v408 = vunpack.c.l.b16 %v275
  %v409 = vunpack.c.h.b16 %v275
  %v410 = vunpack.c.l.b16 %v276
  %v411 = vunpack.c.l.b16 %v277
  %v412 = vunpack.c.h.b16 %v277
  %v413 = vunpack.c.l.b16 %v278
  %v414 = vunpack.c.h.b16 %v278
  %v415 = vunpack.c.l.b16 %v279
  %v416 = vunpack.c.h.b16 %v279
  %v417 = vunpack.c.l.b16 %v280
  %v418 = vunpack.c.h.b16 %v280
  %v419 = vunpack.c.l.b16 %v281
  %v420 = vunpack.c.l.b16 %v282
  %v421 = vunpack.c.h.b16 %v282
  %v422 = vunpack.c.l.b16 %v283
  %v423 = vunpack.c.h.b16 %v283
  %v424 = vunpack.c.l.b16 %v284
  %v425 = vunpack.c.h.b16 %v284
  %v426 = vunpack.c.l.b16 %v285
  %v427 = vunpack.c.h.b16 %v285
  %v428 = vunpack.c.l.b16 %v286
  %v429 = vunpack.c.l.b16 %v287
  %v430 = vunpack.c.h.b16 %v287
  %v431 = vunpack.c.l.b16 %v288
  %v432 = vunpack.c.h.b16 %v288
  %v433 = vunpack.c.l.b16 %v289
  %v434 = vunpack.c.h.b16 %v289
  %v435 = vunpack.c.l.b16 %v290
  %v436 = vunpack.c.h.b16 %v290
  %v437 = vunpack.c.l.b16 %v291
  %v438 = vunpack.c.l.b16 %v292
  %v439 = vunpack.c.h.b16 %v292
  %v440 = vunpack.c.l.b16 %v293
  %v441 = vunpack.c.h.b16 %v293
  %v442 = vunpack.c.l.b16 %v294
  %v443 = vunpack.c.h.b16 %v294
  %v444 = vunpack.c.l.b16 %v295
  %v445 = vunpack.c.h.b16 %v295
  %v446 = vunpack.c.l.b16 %v296
  %v447 = vunpack.c.l.b16 %v297
  %v448 = vunpack.c.h.b16 %v297
  %v449 = vunpack.c.l.b16 %v298
  %v450 = vunpack.c.h.b16 %v298
  %v451 = vunpack.c.l.b16 %v299
  %v452 = vunpack.c.h.b16 %v299
  %v453 = vunpack.c.l.b16 %v300
  %v454 = vunpack.c.h.b16 %v300
  %v455 = vunpack.c.l.b16 %v301
  %v456 = vunpack.c.l.b16 %v302
  %v457 = vunpack.c.h.b16 %v302
  %v458 = vunpack.c.l.b16 %v303
  %v459 = vunpack.c.h.b16 %v303
  %v460 = vunpack.c.l.b16 %v304
  %v461 = vunpack.c.h.b16 %v304
  %v462 = vunpack.c.l.b16 %v305
  %v463 = vunpack.c.h.b16 %v305
  %v464 = vunpack.c.l.b16 %v306
  %v465 = vunpack.c.l.b16 %v307
  %v466 = vunpack.c.h.b16 %v307
  %v467 = vunpack.c.l.b16 %v308
  %v468 = vunpack.c.h.b16 %v308
  %v469 = vunpack.c.l.b16 %v309
  %v470 = vunpack.c.h.b16 %v309
  %v471 = vunpack.c.l.b16 %v310
  %v472 = vunpack.c.h.b16 %v310
  %v473 = vunpack.c.l.b16 %v311
  %v474 = vunpack.c.l.b16 %v312
  %v475 = vunpack.c.h.b16 %v312
  %v476 = vunpack.c.l.b16 %v313
  %v477 = vunpack.c.h.b16 %v313
  %v478 = vunpack.c.l.b16 %v314
  %v479 = vunpack.c.h.b16 %v314
  %v480 = vunpack.c.l.b16 %v315
  %v481 = vunpack.c.h.b16 %v315
  %v482 = vunpack.c.l.b16 %v316
  %v483 = vunpack.c.l.b16 %v317
  %v484 = vunpack.c.h.b16 %v317
  %v485 = vunpack.c.l.b16 %v318
  %v486 = vunpack.c.h.b16 %v318
  %v487 = vunpack.c.l.b16 %v319
  %v488 = vunpack.c.h.b16 %v319
  %v489 = vunpack.c.l.b16 %v320
  %v490 = vunpack.c.h.b16 %v320
  %v491 = vunpack.c.l.b16 %v321
  %v492 = vunpack.c.l.b16 %v322
  %v493 = vunpack.c.h.b16 %v322
  %v494 = vunpack.c.l.b16 %v323
  %v495 = vunpack.c.h.b16 %v323
  %v496 = vunpack.c.l.b16 %v324
  %v497 = vunpack.c.h.b16 %v324
  %v498 = vunpack.c.l.b16 %v325
  %v499 = vunpack.c.h.b16 %v325
  %v500 = vunpack.c.l.b16 %v326
  %v501 = vunpack.c.l.b16 %v327
  %v502 = vunpack.c.h.b16 %v327
  %v503 = vunpack.c.l.b16 %v328
  %v504 = vunpack.c.h.b16 %v328
  %v505 = vunpack.c.l.b16 %v329
  %v506 = vunpack.c.h.b16 %v329
  %v507 = vunpack.c.l.b16 %v330
  %v508 = vunpack.c.h.b16 %v330
  %v509 = vunpack.c.l.b16 %v331
  %v510 = vunpack.c.l.b16 %v332
  %v511 = vunpack.c.h.b16 %v332
  %v512 = vunpack.c.l.b16 %v333
  %v513 = vunpack.c.h.b16 %v333
  %v514 = vunpack.c.l.b16 %v334
  %v515 = vunpack.c.h.b16 %v334
  %v516 = vunpack.c.l.b16 %v335
  %v517 = vunpack.c.h.b16 %v335
  %v518 = vunpack.c.l.b16 %v336
  %v519 = vpack.c.b16 %v411, %v402
  %v520 = vpack.c.b16 %v412, %v403
  %v521 = vpack.c.b16 %v413, %v404
  %v522 = vpack.c.b16 %v414, %v405
  %v523 = vpack.c.b16 %v415, %v406
  %v524 = vpack.c.b16 %v416, %v407
  %v525 = vpack.c.b16 %v417, %v408
  %v526 = vpack.c.b16 %v418, %v409
  %v527 = vpack.c.b16 %v419, %v410
  %v528 = vpack.c.b16 %v429, %v420
  %v529 = vpack.c.b16 %v430, %v421
  %v530 = vpack.c.b16 %v431, %v422
  %v531 = vpack.c.b16 %v432, %v423
  %v532 = vpack.c.b16 %v433, %v424
  %v533 = vpack.c.b16 %v434, %v425
  %v534 = vpack.c.b16 %v435, %v426
  %v535 = vpack.c.b16 %v436, %v427
  %v536 = vpack.c.b16 %v437, %v428
  %v537 = vpack.c.b16 %v447, %v438
  %v538 = vpack.c.b16 %v448, %v439
  %v539 = vpack.c.b16 %v449, %v440
  %v540 = vpack.c.b16 %v450, %v441
  %v541 = vpack.c.b16 %v451, %v442
  %v542 = vpack.c.b16 %v452, %v443
  %v543 = vpack.c.b16 %v453, %v444
  %v544 = vpack.c.b16 %v454, %v445
  %v545 = vpack.c.b16 %v455, %v446
  %v546 = vpack.c.b16 %v465, %v456
  %v547 = vpack.c.b16 %v466, %v457
  %v548 = vpack.c.b16 %v467, %v458
  %v549 = vpack.c.b16 %v468, %v459
  %v550 = vpack.c.b16 %v469, %v460
  %v551 = vpack.c.b16 %v470, %v461
  %v552 = vpack.c.b16 %v471, %v462
  %v553 = vpack.c.b16 %v472, %v463
  %v554 = vpack.c.b16 %v473, %v464
  %v555 = vpack.c.b16 %v483, %v474
  %v556 = vpack.c.b16 %v484, %v475
  %v557 = vpack.c.b16 %v485, %v476
  %v558 = vpack.c.b16 %v486, %v477
  %v559 = vpack.c.b16 %v487, %v478
  %v560 = vpack.c.b16 %v488, %v479
  %v561 = vpack.c.b16 %v489, %v480
  %v562 = vpack.c.b16 %v490, %v481
  %v563 = vpack.c.b16 %v491, %v482
  %v564 = vpack.c.b16 %v501, %v492
  %v565 = vpack.c.b16 %v502, %v493
  %v566 = vpack.c.b16 %v503, %v494
  %v567 = vpack.c.b16 %v504, %v495
  %v568 = vpack.c.b16 %v505, %v496
  %v569 = vpack.c.b16 %v506, %v497
  %v570 = vpack.c.b16 %v507, %v498
  %v571 = vpack.c.b16 %v508, %v499
  %v572 = vpack.c.b16 %v509, %v500
  %v573 = vpack.c.b16 %v510, %v510
  %v574 = vpack.c.b16 %v511, %v511
  %v575 = vpack.c.b16 %v512, %v512
  %v576 = vpack.c.b16 %v513, %v513
  %v577 = vpack.c.b16 %v514, %v514
  %v578 = vpack.c.b16 %v515, %v515
  %v579 = vpack.c.b16 %v516, %v516
  %v580 = vpack.c.b16 %v517, %v517
  %v581 = vpack.c.b16 %v518, %v518
  %vm636 = vcmask 801792
  %v638 = vsel %vm636, %v271, 0
  %vm640 = vcmask 1040384
  %v642 = vsel %vm640, %v573, 0
  %v645 = vsel %vm640, %v574, 0
  %v648 = vsel %vm640, %v575, 0
  %v651 = vsel %vm640, %v576, 0
  %v654 = vsel %vm640, %v577, 0
  %v657 = vsel %vm640, %v578, 0
  %v660 = vsel %vm640, %v579, 0
  %v663 = vsel %vm640, %v580, 0
  %v666 = vsel %vm640, %v581, 0
  %668 = vmatprep.subr.bf16.mxu0 0
  %669 = vmatpush1.bf16.msra.mxu0 0
  %670 = vmatprep.subr.bf16.mxu0 %v645
  %671 = vmatpush1.bf16.msra.mxu0 %v642
  %672 = vmatprep.subr.bf16.mxu0 %v565
  %673 = vmatpush1.bf16.msra.mxu0 %v564
  %674 = vmatprep.subr.bf16.mxu0 %v556
  %675 = vmatpush1.bf16.msra.mxu0 %v555
  %676 = vmatprep.subr.bf16.mxu0 %v547
  %677 = vmatpush1.bf16.msra.mxu0 %v546
  %678 = vmatprep.subr.bf16.mxu0 %v538
  %679 = vmatpush1.bf16.msra.mxu0 %v537
  %680 = vmatprep.subr.bf16.mxu0 %v529
  %681 = vmatpush1.bf16.msra.mxu0 %v528
  %682 = vmatprep.subr.bf16.mxu0 %v520
  %683 = vmatpush1.bf16.msra.mxu0 %v519
  %684 = vmatprep.subr.bf16.mxu0 0
  %685 = vmatpush2.bf16.msra.mxu0 0
  %686 = vmatprep.subr.bf16.mxu0 0
  %687 = vmatpush2.bf16.msra.mxu0 0
  %688 = vmatprep.subr.bf16.mxu0 0
  %689 = vmatpush2.bf16.msra.mxu0 0
  %690 = vmatprep.subr.bf16.mxu0 0
  %691 = vmatpush2.bf16.msra.mxu0 0
  %692 = vmatprep.subr.bf16.mxu0 0
  %693 = vmatpush2.bf16.msra.mxu0 0
  %694 = vmatprep.subr.bf16.mxu0 0
  %695 = vmatpush2.bf16.msra.mxu0 0
  %696 = vmatprep.subr.bf16.mxu0 0
  %697 = vmatpush2.bf16.msra.mxu0 0
  %698 = vmatprep.subr.bf16.mxu0 0
  %699 = vmatpush2.bf16.msra.mxu0 0
  %700 = vmatprep.mubr.bf16.mxu0 0
  %701 = vmatmul.mubr.bf16.gmra.mxu0 %v638
  %v702 = vpop.f32.mrf.mxu0
  %v703 = vadd.f32 0.0, %v702
  %v704 = vpop.f32.mrf.mxu0
  %v705 = vadd.f32 0.0, %v704
  %v706 = vpop.f32.mrf.mxu0
  %v707 = vpop.f32.mrf.mxu0
  %708 = vdwg.mxu0
  %709 = vmatprep.subr.bf16.mxu0 0
  %710 = vmatpush1.bf16.msra.mxu0 0
  %711 = vmatprep.subr.bf16.mxu0 %v651
  %712 = vmatpush1.bf16.msra.mxu0 %v648
  %713 = vmatprep.subr.bf16.mxu0 %v567
  %714 = vmatpush1.bf16.msra.mxu0 %v566
  %715 = vmatprep.subr.bf16.mxu0 %v558
  %716 = vmatpush1.bf16.msra.mxu0 %v557
  %717 = vmatprep.subr.bf16.mxu0 %v549
  %718 = vmatpush1.bf16.msra.mxu0 %v548
  %719 = vmatprep.subr.bf16.mxu0 %v540
  %720 = vmatpush1.bf16.msra.mxu0 %v539
  %721 = vmatprep.subr.bf16.mxu0 %v531
  %722 = vmatpush1.bf16.msra.mxu0 %v530
  %723 = vmatprep.subr.bf16.mxu0 %v522
  %724 = vmatpush1.bf16.msra.mxu0 %v521
  %725 = vmatprep.subr.bf16.mxu0 0
  %726 = vmatpush2.bf16.msra.mxu0 0
  %727 = vmatprep.subr.bf16.mxu0 0
  %728 = vmatpush2.bf16.msra.mxu0 0
  %729 = vmatprep.subr.bf16.mxu0 0
  %730 = vmatpush2.bf16.msra.mxu0 0
  %731 = vmatprep.subr.bf16.mxu0 0
  %732 = vmatpush2.bf16.msra.mxu0 0
  %733 = vmatprep.subr.bf16.mxu0 0
  %734 = vmatpush2.bf16.msra.mxu0 0
  %735 = vmatprep.subr.bf16.mxu0 0
  %736 = vmatpush2.bf16.msra.mxu0 0
  %737 = vmatprep.subr.bf16.mxu0 0
  %738 = vmatpush2.bf16.msra.mxu0 0
  %739 = vmatprep.subr.bf16.mxu0 0
  %740 = vmatpush2.bf16.msra.mxu0 0
  %741 = vmatprep.mubr.bf16.mxu0 0
  %742 = vmatmul.mubr.bf16.gmra.mxu0 %v638
  %v743 = vpop.f32.mrf.mxu0
  %v744 = vadd.f32 0.0, %v743
  %v745 = vpop.f32.mrf.mxu0
  %v746 = vadd.f32 0.0, %v745
  %v747 = vpop.f32.mrf.mxu0
  %v748 = vpop.f32.mrf.mxu0
  %749 = vdwg.mxu0
  %750 = vmatprep.subr.bf16.mxu0 0
  %751 = vmatpush1.bf16.msra.mxu0 0
  %752 = vmatprep.subr.bf16.mxu0 %v657
  %753 = vmatpush1.bf16.msra.mxu0 %v654
  %754 = vmatprep.subr.bf16.mxu0 %v569
  %755 = vmatpush1.bf16.msra.mxu0 %v568
  %756 = vmatprep.subr.bf16.mxu0 %v560
  %757 = vmatpush1.bf16.msra.mxu0 %v559
  %758 = vmatprep.subr.bf16.mxu0 %v551
  %759 = vmatpush1.bf16.msra.mxu0 %v550
  %760 = vmatprep.subr.bf16.mxu0 %v542
  %761 = vmatpush1.bf16.msra.mxu0 %v541
  %762 = vmatprep.subr.bf16.mxu0 %v533
  %763 = vmatpush1.bf16.msra.mxu0 %v532
  %764 = vmatprep.subr.bf16.mxu0 %v524
  %765 = vmatpush1.bf16.msra.mxu0 %v523
  %766 = vmatprep.subr.bf16.mxu0 0
  %767 = vmatpush2.bf16.msra.mxu0 0
  %768 = vmatprep.subr.bf16.mxu0 0
  %769 = vmatpush2.bf16.msra.mxu0 0
  %770 = vmatprep.subr.bf16.mxu0 0
  %771 = vmatpush2.bf16.msra.mxu0 0
  %772 = vmatprep.subr.bf16.mxu0 0
  %773 = vmatpush2.bf16.msra.mxu0 0
  %774 = vmatprep.subr.bf16.mxu0 0
  %775 = vmatpush2.bf16.msra.mxu0 0
  %776 = vmatprep.subr.bf16.mxu0 0
  %777 = vmatpush2.bf16.msra.mxu0 0
  %778 = vmatprep.subr.bf16.mxu0 0
  %779 = vmatpush2.bf16.msra.mxu0 0
  %780 = vmatprep.subr.bf16.mxu0 0
  %781 = vmatpush2.bf16.msra.mxu0 0
  %782 = vmatprep.mubr.bf16.mxu0 0
  %783 = vmatmul.mubr.bf16.gmra.mxu0 %v638
  %v784 = vpop.f32.mrf.mxu0
  %v785 = vadd.f32 0.0, %v784
  %v786 = vpop.f32.mrf.mxu0
  %v787 = vadd.f32 0.0, %v786
  %v788 = vpop.f32.mrf.mxu0
  %v789 = vpop.f32.mrf.mxu0
  %790 = vdwg.mxu0
  %791 = vmatprep.subr.bf16.mxu0 0
  %792 = vmatpush1.bf16.msra.mxu0 0
  %793 = vmatprep.subr.bf16.mxu0 %v663
  %794 = vmatpush1.bf16.msra.mxu0 %v660
  %795 = vmatprep.subr.bf16.mxu0 %v571
  %796 = vmatpush1.bf16.msra.mxu0 %v570
  %797 = vmatprep.subr.bf16.mxu0 %v562
  %798 = vmatpush1.bf16.msra.mxu0 %v561
  %799 = vmatprep.subr.bf16.mxu0 %v553
  %800 = vmatpush1.bf16.msra.mxu0 %v552
  %801 = vmatprep.subr.bf16.mxu0 %v544
  %802 = vmatpush1.bf16.msra.mxu0 %v543
  %803 = vmatprep.subr.bf16.mxu0 %v535
  %804 = vmatpush1.bf16.msra.mxu0 %v534
  %805 = vmatprep.subr.bf16.mxu0 %v526
  %806 = vmatpush1.bf16.msra.mxu0 %v525
  %807 = vmatprep.subr.bf16.mxu0 0
  %808 = vmatpush2.bf16.msra.mxu0 0
  %809 = vmatprep.subr.bf16.mxu0 0
  %810 = vmatpush2.bf16.msra.mxu0 0
  %811 = vmatprep.subr.bf16.mxu0 0
  %812 = vmatpush2.bf16.msra.mxu0 0
  %813 = vmatprep.subr.bf16.mxu0 0
  %814 = vmatpush2.bf16.msra.mxu0 0
  %815 = vmatprep.subr.bf16.mxu0 0
  %816 = vmatpush2.bf16.msra.mxu0 0
  %817 = vmatprep.subr.bf16.mxu0 0
  %818 = vmatpush2.bf16.msra.mxu0 0
  %819 = vmatprep.subr.bf16.mxu0 0
  %820 = vmatpush2.bf16.msra.mxu0 0
  %821 = vmatprep.subr.bf16.mxu0 0
  %822 = vmatpush2.bf16.msra.mxu0 0
  %823 = vmatprep.mubr.bf16.mxu0 0
  %824 = vmatmul.mubr.bf16.gmra.mxu0 %v638
  %v825 = vpop.f32.mrf.mxu0
  %v826 = vadd.f32 0.0, %v825
  %v827 = vpop.f32.mrf.mxu0
  %v828 = vadd.f32 0.0, %v827
  %v829 = vpop.f32.mrf.mxu0
  %v830 = vpop.f32.mrf.mxu0
  %831 = vdwg.mxu0
  %832 = vmatprep.subr.bf16.mxu0 0
  %833 = vmatpush1.bf16.msra.mxu0 0
  %834 = vmatprep.subr.bf16.mxu0 0
  %835 = vmatpush1.bf16.msra.mxu0 %v666
  %836 = vmatprep.subr.bf16.mxu0 0
  %837 = vmatpush1.bf16.msra.mxu0 %v572
  %838 = vmatprep.subr.bf16.mxu0 0
  %839 = vmatpush1.bf16.msra.mxu0 %v563
  %840 = vmatprep.subr.bf16.mxu0 0
  %841 = vmatpush1.bf16.msra.mxu0 %v554
  %842 = vmatprep.subr.bf16.mxu0 0
  %843 = vmatpush1.bf16.msra.mxu0 %v545
  %844 = vmatprep.subr.bf16.mxu0 0
  %845 = vmatpush1.bf16.msra.mxu0 %v536
  %846 = vmatprep.subr.bf16.mxu0 0
  %847 = vmatpush1.bf16.msra.mxu0 %v527
  %848 = vmatprep.subr.bf16.mxu0 0
  %849 = vmatpush2.bf16.msra.mxu0 0
  %850 = vmatprep.subr.bf16.mxu0 0
  %851 = vmatpush2.bf16.msra.mxu0 0
  %852 = vmatprep.subr.bf16.mxu0 0
  %853 = vmatpush2.bf16.msra.mxu0 0
  %854 = vmatprep.subr.bf16.mxu0 0
  %855 = vmatpush2.bf16.msra.mxu0 0
  %856 = vmatprep.subr.bf16.mxu0 0
  %857 = vmatpush2.bf16.msra.mxu0 0
  %858 = vmatprep.subr.bf16.mxu0 0
  %859 = vmatpush2.bf16.msra.mxu0 0
  %860 = vmatprep.subr.bf16.mxu0 0
  %861 = vmatpush2.bf16.msra.mxu0 0
  %862 = vmatprep.subr.bf16.mxu0 0
  %863 = vmatpush2.bf16.msra.mxu0 0
  %864 = vmatprep.mubr.bf16.mxu0 0
  %865 = vmatmul.mubr.bf16.gmra.mxu0 %v638
  %v866 = vpop.f32.mrf.mxu0
  %v867 = vadd.f32 0.0, %v866
  %v868 = vpop.f32.mrf.mxu0
  %v869 = vpop.f32.mrf.mxu0
  %v870 = vpop.f32.mrf.mxu0
  %871 = vdwg.mxu0
  %v872 = vpack.c.bf16 %v703, %v703
  %v873 = vpack.c.bf16 %v705, %v705
  %v874 = vpack.c.bf16 %v744, %v744
  %v875 = vpack.c.bf16 %v746, %v746
  %v876 = vpack.c.bf16 %v785, %v785
  %v877 = vpack.c.bf16 %v787, %v787
  %v878 = vpack.c.bf16 %v826, %v826
  %v879 = vpack.c.bf16 %v828, %v828
  %v880 = vpack.c.bf16 %v867, %v867
  %v881 = vld [vmem:[%s3] sm:$0xf]
  %v882 = vld [vmem:[%s3 + $0x4] sm:$0xf]
  %s883 = scalar_lea.vmem %s3, 8
  %v884 = vld [vmem:[%s883] sm:$0xf]
  %v885 = vld [vmem:[%s883 + $0x4] sm:$0xf]
  %v888 = vunpack.c.l.b16 %v884
  %v889 = vunpack.c.l.b16 %v885
  %v890 = vpack.c.b16 %v889, %v888
  %v892 = vsel %vm216, %v890, 0
  %vm894 = vcmask 1043456
  %v896 = vsel %vm894, %v873, 0
  %898 = vmatprep.subr.bf16.mxu0 0
  %899 = vmatpush1.bf16.msra.mxu0 0
  %900 = vmatprep.subr.bf16.mxu0 0
  %901 = vmatpush1.bf16.msra.mxu0 0
  %902 = vmatprep.subr.bf16.mxu0 0
  %903 = vmatpush1.bf16.msra.mxu0 0
  %904 = vmatprep.subr.bf16.mxu0 0
  %905 = vmatpush1.bf16.msra.mxu0 0
  %906 = vmatprep.subr.bf16.mxu0 0
  %907 = vmatpush1.bf16.msra.mxu0 0
  %908 = vmatprep.subr.bf16.mxu0 0
  %909 = vmatpush1.bf16.msra.mxu0 0
  %910 = vmatprep.subr.bf16.mxu0 0
  %911 = vmatpush1.bf16.msra.mxu0 0
  %912 = vmatprep.subr.bf16.mxu0 0
  %913 = vmatpush1.bf16.msra.mxu0 %v896
  %914 = vmatprep.subr.bf16.mxu0 0
  %915 = vmatpush2.bf16.msra.mxu0 0
  %916 = vmatprep.subr.bf16.mxu0 0
  %917 = vmatpush2.bf16.msra.mxu0 0
  %918 = vmatprep.subr.bf16.mxu0 0
  %919 = vmatpush2.bf16.msra.mxu0 0
  %920 = vmatprep.subr.bf16.mxu0 0
  %921 = vmatpush2.bf16.msra.mxu0 0
  %922 = vmatprep.subr.bf16.mxu0 0
  %923 = vmatpush2.bf16.msra.mxu0 0
  %924 = vmatprep.subr.bf16.mxu0 0
  %925 = vmatpush2.bf16.msra.mxu0 0
  %926 = vmatprep.subr.bf16.mxu0 0
  %927 = vmatpush2.bf16.msra.mxu0 0
  %928 = vmatprep.subr.bf16.mxu0 0
  %929 = vmatpush2.bf16.msra.mxu0 0
  %930 = vmatprep.mubr.bf16.mxu0 0
  %931 = vmatmul.mubr.bf16.gmra.mxu0 %v892
  %v932 = vpop.f32.mrf.mxu0
  %v933 = vadd.f32 0.0, %v932
  %v934 = vpop.f32.mrf.mxu0
  %v935 = vpop.f32.mrf.mxu0
  %v936 = vadd.f32 0.0, %v935
  %v937 = vpop.f32.mrf.mxu0
  %938 = vdwg.mxu0
  %v941 = vunpack.c.l.b16 %v881
  %v942 = vunpack.c.l.b16 %v882
  %v943 = vpack.c.b16 %v942, %v941
  %v945 = vsel %vm216, %v943, 0
  %v948 = vsel %vm894, %v872, 0
  %950 = vmatprep.subr.bf16.mxu0 0
  %951 = vmatpush1.bf16.msra.mxu0 0
  %952 = vmatprep.subr.bf16.mxu0 0
  %953 = vmatpush1.bf16.msra.mxu0 0
  %954 = vmatprep.subr.bf16.mxu0 0
  %955 = vmatpush1.bf16.msra.mxu0 0
  %956 = vmatprep.subr.bf16.mxu0 0
  %957 = vmatpush1.bf16.msra.mxu0 0
  %958 = vmatprep.subr.bf16.mxu0 0
  %959 = vmatpush1.bf16.msra.mxu0 0
  %960 = vmatprep.subr.bf16.mxu0 0
  %961 = vmatpush1.bf16.msra.mxu0 0
  %962 = vmatprep.subr.bf16.mxu0 0
  %963 = vmatpush1.bf16.msra.mxu0 0
  %964 = vmatprep.subr.bf16.mxu0 0
  %965 = vmatpush1.bf16.msra.mxu0 %v948
  %966 = vmatprep.subr.bf16.mxu0 0
  %967 = vmatpush2.bf16.msra.mxu0 0
  %968 = vmatprep.subr.bf16.mxu0 0
  %969 = vmatpush2.bf16.msra.mxu0 0
  %970 = vmatprep.subr.bf16.mxu0 0
  %971 = vmatpush2.bf16.msra.mxu0 0
  %972 = vmatprep.subr.bf16.mxu0 0
  %973 = vmatpush2.bf16.msra.mxu0 0
  %974 = vmatprep.subr.bf16.mxu0 0
  %975 = vmatpush2.bf16.msra.mxu0 0
  %976 = vmatprep.subr.bf16.mxu0 0
  %977 = vmatpush2.bf16.msra.mxu0 0
  %978 = vmatprep.subr.bf16.mxu0 0
  %979 = vmatpush2.bf16.msra.mxu0 0
  %980 = vmatprep.subr.bf16.mxu0 0
  %981 = vmatpush2.bf16.msra.mxu0 0
  %982 = vmatprep.mubr.bf16.mxu0 0
  %983 = vmatmul.mubr.bf16.gmra.mxu0 %v945
  %v984 = vpop.f32.mrf.mxu0
  %v985 = vadd.f32 %v933, %v984
  %v986 = vpop.f32.mrf.mxu0
  %v987 = vpop.f32.mrf.mxu0
  %v988 = vadd.f32 %v936, %v987
  %v989 = vpop.f32.mrf.mxu0
  %990 = vdwg.mxu0
  %s991 = scalar_lea.vmem %s3, 16
  %v992 = vld [vmem:[%s991] sm:$0xf]
  %v993 = vld [vmem:[%s991 + $0x4] sm:$0xf]
  %v996 = vunpack.c.l.b16 %v992
  %v997 = vunpack.c.l.b16 %v993
  %v998 = vpack.c.b16 %v997, %v996
  %v1000 = vsel %vm216, %v998, 0
  %v1003 = vsel %vm894, %v874, 0
  %1005 = vmatprep.subr.bf16.mxu0 0
  %1006 = vmatpush1.bf16.msra.mxu0 0
  %1007 = vmatprep.subr.bf16.mxu0 0
  %1008 = vmatpush1.bf16.msra.mxu0 0
  %1009 = vmatprep.subr.bf16.mxu0 0
  %1010 = vmatpush1.bf16.msra.mxu0 0
  %1011 = vmatprep.subr.bf16.mxu0 0
  %1012 = vmatpush1.bf16.msra.mxu0 0
  %1013 = vmatprep.subr.bf16.mxu0 0
  %1014 = vmatpush1.bf16.msra.mxu0 0
  %1015 = vmatprep.subr.bf16.mxu0 0
  %1016 = vmatpush1.bf16.msra.mxu0 0
  %1017 = vmatprep.subr.bf16.mxu0 0
  %1018 = vmatpush1.bf16.msra.mxu0 0
  %1019 = vmatprep.subr.bf16.mxu0 0
  %1020 = vmatpush1.bf16.msra.mxu0 %v1003
  %1021 = vmatprep.subr.bf16.mxu0 0
  %1022 = vmatpush2.bf16.msra.mxu0 0
  %1023 = vmatprep.subr.bf16.mxu0 0
  %1024 = vmatpush2.bf16.msra.mxu0 0
  %1025 = vmatprep.subr.bf16.mxu0 0
  %1026 = vmatpush2.bf16.msra.mxu0 0
  %1027 = vmatprep.subr.bf16.mxu0 0
  %1028 = vmatpush2.bf16.msra.mxu0 0
  %1029 = vmatprep.subr.bf16.mxu0 0
  %1030 = vmatpush2.bf16.msra.mxu0 0
  %1031 = vmatprep.subr.bf16.mxu0 0
  %1032 = vmatpush2.bf16.msra.mxu0 0
  %1033 = vmatprep.subr.bf16.mxu0 0
  %1034 = vmatpush2.bf16.msra.mxu0 0
  %1035 = vmatprep.subr.bf16.mxu0 0
  %1036 = vmatpush2.bf16.msra.mxu0 0
  %1037 = vmatprep.mubr.bf16.mxu0 0
  %1038 = vmatmul.mubr.bf16.gmra.mxu0 %v1000
  %v1039 = vpop.f32.mrf.mxu0
  %v1040 = vadd.f32 0.0, %v1039
  %v1041 = vpop.f32.mrf.mxu0
  %v1042 = vpop.f32.mrf.mxu0
  %v1043 = vadd.f32 0.0, %v1042
  %v1044 = vpop.f32.mrf.mxu0
  %1045 = vdwg.mxu0
  %v1046 = vadd.f32 %v985, %v1040
  %v1047 = vadd.f32 %v988, %v1043
  %s1048 = scalar_lea.vmem %s3, 24
  %v1049 = vld [vmem:[%s1048] sm:$0xf]
  %v1050 = vld [vmem:[%s1048 + $0x4] sm:$0xf]
  %v1053 = vunpack.c.l.b16 %v1049
  %v1054 = vunpack.c.l.b16 %v1050
  %v1055 = vpack.c.b16 %v1054, %v1053
  %v1057 = vsel %vm216, %v1055, 0
  %v1060 = vsel %vm894, %v875, 0
  %1062 = vmatprep.subr.bf16.mxu0 0
  %1063 = vmatpush1.bf16.msra.mxu0 0
  %1064 = vmatprep.subr.bf16.mxu0 0
  %1065 = vmatpush1.bf16.msra.mxu0 0
  %1066 = vmatprep.subr.bf16.mxu0 0
  %1067 = vmatpush1.bf16.msra.mxu0 0
  %1068 = vmatprep.subr.bf16.mxu0 0
  %1069 = vmatpush1.bf16.msra.mxu0 0
  %1070 = vmatprep.subr.bf16.mxu0 0
  %1071 = vmatpush1.bf16.msra.mxu0 0
  %1072 = vmatprep.subr.bf16.mxu0 0
  %1073 = vmatpush1.bf16.msra.mxu0 0
  %1074 = vmatprep.subr.bf16.mxu0 0
  %1075 = vmatpush1.bf16.msra.mxu0 0
  %1076 = vmatprep.subr.bf16.mxu0 0
  %1077 = vmatpush1.bf16.msra.mxu0 %v1060
  %1078 = vmatprep.subr.bf16.mxu0 0
  %1079 = vmatpush2.bf16.msra.mxu0 0
  %1080 = vmatprep.subr.bf16.mxu0 0
  %1081 = vmatpush2.bf16.msra.mxu0 0
  %1082 = vmatprep.subr.bf16.mxu0 0
  %1083 = vmatpush2.bf16.msra.mxu0 0
  %1084 = vmatprep.subr.bf16.mxu0 0
  %1085 = vmatpush2.bf16.msra.mxu0 0
  %1086 = vmatprep.subr.bf16.mxu0 0
  %1087 = vmatpush2.bf16.msra.mxu0 0
  %1088 = vmatprep.subr.bf16.mxu0 0
  %1089 = vmatpush2.bf16.msra.mxu0 0
  %1090 = vmatprep.subr.bf16.mxu0 0
  %1091 = vmatpush2.bf16.msra.mxu0 0
  %1092 = vmatprep.subr.bf16.mxu0 0
  %1093 = vmatpush2.bf16.msra.mxu0 0
  %1094 = vmatprep.mubr.bf16.mxu0 0
  %1095 = vmatmul.mubr.bf16.gmra.mxu0 %v1057
  %v1096 = vpop.f32.mrf.mxu0
  %v1097 = vadd.f32 0.0, %v1096
  %v1098 = vpop.f32.mrf.mxu0
  %v1099 = vpop.f32.mrf.mxu0
  %v1100 = vadd.f32 0.0, %v1099
  %v1101 = vpop.f32.mrf.mxu0
  %1102 = vdwg.mxu0
  %v1103 = vadd.f32 %v1046, %v1097
  %v1104 = vadd.f32 %v1047, %v1100
  %s1105 = scalar_lea.vmem %s3, 32
  %v1106 = vld [vmem:[%s1105] sm:$0xf]
  %v1107 = vld [vmem:[%s1105 + $0x4] sm:$0xf]
  %v1110 = vunpack.c.l.b16 %v1106
  %v1111 = vunpack.c.l.b16 %v1107
  %v1112 = vpack.c.b16 %v1111, %v1110
  %v1114 = vsel %vm216, %v1112, 0
  %v1117 = vsel %vm894, %v876, 0
  %1119 = vmatprep.subr.bf16.mxu0 0
  %1120 = vmatpush1.bf16.msra.mxu0 0
  %1121 = vmatprep.subr.bf16.mxu0 0
  %1122 = vmatpush1.bf16.msra.mxu0 0
  %1123 = vmatprep.subr.bf16.mxu0 0
  %1124 = vmatpush1.bf16.msra.mxu0 0
  %1125 = vmatprep.subr.bf16.mxu0 0
  %1126 = vmatpush1.bf16.msra.mxu0 0
  %1127 = vmatprep.subr.bf16.mxu0 0
  %1128 = vmatpush1.bf16.msra.mxu0 0
  %1129 = vmatprep.subr.bf16.mxu0 0
  %1130 = vmatpush1.bf16.msra.mxu0 0
  %1131 = vmatprep.subr.bf16.mxu0 0
  %1132 = vmatpush1.bf16.msra.mxu0 0
  %1133 = vmatprep.subr.bf16.mxu0 0
  %1134 = vmatpush1.bf16.msra.mxu0 %v1117
  %1135 = vmatprep.subr.bf16.mxu0 0
  %1136 = vmatpush2.bf16.msra.mxu0 0
  %1137 = vmatprep.subr.bf16.mxu0 0
  %1138 = vmatpush2.bf16.msra.mxu0 0
  %1139 = vmatprep.subr.bf16.mxu0 0
  %1140 = vmatpush2.bf16.msra.mxu0 0
  %1141 = vmatprep.subr.bf16.mxu0 0
  %1142 = vmatpush2.bf16.msra.mxu0 0
  %1143 = vmatprep.subr.bf16.mxu0 0
  %1144 = vmatpush2.bf16.msra.mxu0 0
  %1145 = vmatprep.subr.bf16.mxu0 0
  %1146 = vmatpush2.bf16.msra.mxu0 0
  %1147 = vmatprep.subr.bf16.mxu0 0
  %1148 = vmatpush2.bf16.msra.mxu0 0
  %1149 = vmatprep.subr.bf16.mxu0 0
  %1150 = vmatpush2.bf16.msra.mxu0 0
  %1151 = vmatprep.mubr.bf16.mxu0 0
  %1152 = vmatmul.mubr.bf16.gmra.mxu0 %v1114
  %v1153 = vpop.f32.mrf.mxu0
  %v1154 = vadd.f32 0.0, %v1153
  %v1155 = vpop.f32.mrf.mxu0
  %v1156 = vpop.f32.mrf.mxu0
  %v1157 = vadd.f32 0.0, %v1156
  %v1158 = vpop.f32.mrf.mxu0
  %1159 = vdwg.mxu0
  %v1160 = vadd.f32 %v1103, %v1154
  %v1161 = vadd.f32 %v1104, %v1157
  %s1162 = scalar_lea.vmem %s3, 40
  %v1163 = vld [vmem:[%s1162] sm:$0xf]
  %v1164 = vld [vmem:[%s1162 + $0x4] sm:$0xf]
  %v1167 = vunpack.c.l.b16 %v1163
  %v1168 = vunpack.c.l.b16 %v1164
  %v1169 = vpack.c.b16 %v1168, %v1167
  %v1171 = vsel %vm216, %v1169, 0
  %v1174 = vsel %vm894, %v877, 0
  %1176 = vmatprep.subr.bf16.mxu0 0
  %1177 = vmatpush1.bf16.msra.mxu0 0
  %1178 = vmatprep.subr.bf16.mxu0 0
  %1179 = vmatpush1.bf16.msra.mxu0 0
  %1180 = vmatprep.subr.bf16.mxu0 0
  %1181 = vmatpush1.bf16.msra.mxu0 0
  %1182 = vmatprep.subr.bf16.mxu0 0
  %1183 = vmatpush1.bf16.msra.mxu0 0
  %1184 = vmatprep.subr.bf16.mxu0 0
  %1185 = vmatpush1.bf16.msra.mxu0 0
  %1186 = vmatprep.subr.bf16.mxu0 0
  %1187 = vmatpush1.bf16.msra.mxu0 0
  %1188 = vmatprep.subr.bf16.mxu0 0
  %1189 = vmatpush1.bf16.msra.mxu0 0
  %1190 = vmatprep.subr.bf16.mxu0 0
  %1191 = vmatpush1.bf16.msra.mxu0 %v1174
  %1192 = vmatprep.subr.bf16.mxu0 0
  %1193 = vmatpush2.bf16.msra.mxu0 0
  %1194 = vmatprep.subr.bf16.mxu0 0
  %1195 = vmatpush2.bf16.msra.mxu0 0
  %1196 = vmatprep.subr.bf16.mxu0 0
  %1197 = vmatpush2.bf16.msra.mxu0 0
  %1198 = vmatprep.subr.bf16.mxu0 0
  %1199 = vmatpush2.bf16.msra.mxu0 0
  %1200 = vmatprep.subr.bf16.mxu0 0
  %1201 = vmatpush2.bf16.msra.mxu0 0
  %1202 = vmatprep.subr.bf16.mxu0 0
  %1203 = vmatpush2.bf16.msra.mxu0 0
  %1204 = vmatprep.subr.bf16.mxu0 0
  %1205 = vmatpush2.bf16.msra.mxu0 0
  %1206 = vmatprep.subr.bf16.mxu0 0
  %1207 = vmatpush2.bf16.msra.mxu0 0
  %1208 = vmatprep.mubr.bf16.mxu0 0
  %1209 = vmatmul.mubr.bf16.gmra.mxu0 %v1171
  %v1210 = vpop.f32.mrf.mxu0
  %v1211 = vadd.f32 0.0, %v1210
  %v1212 = vpop.f32.mrf.mxu0
  %v1213 = vpop.f32.mrf.mxu0
  %v1214 = vadd.f32 0.0, %v1213
  %v1215 = vpop.f32.mrf.mxu0
  %1216 = vdwg.mxu0
  %v1217 = vadd.f32 %v1160, %v1211
  %v1218 = vadd.f32 %v1161, %v1214
  %s1219 = scalar_lea.vmem %s3, 48
  %v1220 = vld [vmem:[%s1219] sm:$0xf]
  %v1221 = vld [vmem:[%s1219 + $0x4] sm:$0xf]
  %v1224 = vunpack.c.l.b16 %v1220
  %v1225 = vunpack.c.l.b16 %v1221
  %v1226 = vpack.c.b16 %v1225, %v1224
  %v1228 = vsel %vm216, %v1226, 0
  %v1231 = vsel %vm894, %v878, 0
  %1233 = vmatprep.subr.bf16.mxu0 0
  %1234 = vmatpush1.bf16.msra.mxu0 0
  %1235 = vmatprep.subr.bf16.mxu0 0
  %1236 = vmatpush1.bf16.msra.mxu0 0
  %1237 = vmatprep.subr.bf16.mxu0 0
  %1238 = vmatpush1.bf16.msra.mxu0 0
  %1239 = vmatprep.subr.bf16.mxu0 0
  %1240 = vmatpush1.bf16.msra.mxu0 0
  %1241 = vmatprep.subr.bf16.mxu0 0
  %1242 = vmatpush1.bf16.msra.mxu0 0
  %1243 = vmatprep.subr.bf16.mxu0 0
  %1244 = vmatpush1.bf16.msra.mxu0 0
  %1245 = vmatprep.subr.bf16.mxu0 0
  %1246 = vmatpush1.bf16.msra.mxu0 0
  %1247 = vmatprep.subr.bf16.mxu0 0
  %1248 = vmatpush1.bf16.msra.mxu0 %v1231
  %1249 = vmatprep.subr.bf16.mxu0 0
  %1250 = vmatpush2.bf16.msra.mxu0 0
  %1251 = vmatprep.subr.bf16.mxu0 0
  %1252 = vmatpush2.bf16.msra.mxu0 0
  %1253 = vmatprep.subr.bf16.mxu0 0
  %1254 = vmatpush2.bf16.msra.mxu0 0
  %1255 = vmatprep.subr.bf16.mxu0 0
  %1256 = vmatpush2.bf16.msra.mxu0 0
  %1257 = vmatprep.subr.bf16.mxu0 0
  %1258 = vmatpush2.bf16.msra.mxu0 0
  %1259 = vmatprep.subr.bf16.mxu0 0
  %1260 = vmatpush2.bf16.msra.mxu0 0
  %1261 = vmatprep.subr.bf16.mxu0 0
  %1262 = vmatpush2.bf16.msra.mxu0 0
  %1263 = vmatprep.subr.bf16.mxu0 0
  %1264 = vmatpush2.bf16.msra.mxu0 0
  %1265 = vmatprep.mubr.bf16.mxu0 0
  %1266 = vmatmul.mubr.bf16.gmra.mxu0 %v1228
  %v1267 = vpop.f32.mrf.mxu0
  %v1268 = vadd.f32 0.0, %v1267
  %v1269 = vpop.f32.mrf.mxu0
  %v1270 = vpop.f32.mrf.mxu0
  %v1271 = vadd.f32 0.0, %v1270
  %v1272 = vpop.f32.mrf.mxu0
  %1273 = vdwg.mxu0
  %v1274 = vadd.f32 %v1217, %v1268
  %v1275 = vadd.f32 %v1218, %v1271
  %s1276 = scalar_lea.vmem %s3, 56
  %v1277 = vld [vmem:[%s1276] sm:$0xf]
  %v1278 = vld [vmem:[%s1276 + $0x4] sm:$0xf]
  %v1281 = vunpack.c.l.b16 %v1277
  %v1282 = vunpack.c.l.b16 %v1278
  %v1283 = vpack.c.b16 %v1282, %v1281
  %v1285 = vsel %vm216, %v1283, 0
  %v1288 = vsel %vm894, %v879, 0
  %1290 = vmatprep.subr.bf16.mxu0 0
  %1291 = vmatpush1.bf16.msra.mxu0 0
  %1292 = vmatprep.subr.bf16.mxu0 0
  %1293 = vmatpush1.bf16.msra.mxu0 0
  %1294 = vmatprep.subr.bf16.mxu0 0
  %1295 = vmatpush1.bf16.msra.mxu0 0
  %1296 = vmatprep.subr.bf16.mxu0 0
  %1297 = vmatpush1.bf16.msra.mxu0 0
  %1298 = vmatprep.subr.bf16.mxu0 0
  %1299 = vmatpush1.bf16.msra.mxu0 0
  %1300 = vmatprep.subr.bf16.mxu0 0
  %1301 = vmatpush1.bf16.msra.mxu0 0
  %1302 = vmatprep.subr.bf16.mxu0 0
  %1303 = vmatpush1.bf16.msra.mxu0 0
  %1304 = vmatprep.subr.bf16.mxu0 0
  %1305 = vmatpush1.bf16.msra.mxu0 %v1288
  %1306 = vmatprep.subr.bf16.mxu0 0
  %1307 = vmatpush2.bf16.msra.mxu0 0
  %1308 = vmatprep.subr.bf16.mxu0 0
  %1309 = vmatpush2.bf16.msra.mxu0 0
  %1310 = vmatprep.subr.bf16.mxu0 0
  %1311 = vmatpush2.bf16.msra.mxu0 0
  %1312 = vmatprep.subr.bf16.mxu0 0
  %1313 = vmatpush2.bf16.msra.mxu0 0
  %1314 = vmatprep.subr.bf16.mxu0 0
  %1315 = vmatpush2.bf16.msra.mxu0 0
  %1316 = vmatprep.subr.bf16.mxu0 0
  %1317 = vmatpush2.bf16.msra.mxu0 0
  %1318 = vmatprep.subr.bf16.mxu0 0
  %1319 = vmatpush2.bf16.msra.mxu0 0
  %1320 = vmatprep.subr.bf16.mxu0 0
  %1321 = vmatpush2.bf16.msra.mxu0 0
  %1322 = vmatprep.mubr.bf16.mxu0 0
  %1323 = vmatmul.mubr.bf16.gmra.mxu0 %v1285
  %v1324 = vpop.f32.mrf.mxu0
  %v1325 = vadd.f32 0.0, %v1324
  %v1326 = vpop.f32.mrf.mxu0
  %v1327 = vpop.f32.mrf.mxu0
  %v1328 = vadd.f32 0.0, %v1327
  %v1329 = vpop.f32.mrf.mxu0
  %1330 = vdwg.mxu0
  %v1331 = vadd.f32 %v1274, %v1325
  %v1332 = vadd.f32 %v1275, %v1328
  %s1333 = scalar_lea.vmem %s3, 64
  %v1334 = vld [vmem:[%s1333] sm:$0xf]
  %v1335 = vld [vmem:[%s1333 + $0x4] sm:$0xf]
  %v1338 = vunpack.c.l.b16 %v1334
  %v1339 = vunpack.c.l.b16 %v1335
  %v1340 = vpack.c.b16 %v1339, %v1338
  %v1342 = vsel %vm216, %v1340, 0
  %v1345 = vsel %vm894, %v880, 0
  %1347 = vmatprep.subr.bf16.mxu0 0
  %1348 = vmatpush1.bf16.msra.mxu0 0
  %1349 = vmatprep.subr.bf16.mxu0 0
  %1350 = vmatpush1.bf16.msra.mxu0 0
  %1351 = vmatprep.subr.bf16.mxu0 0
  %1352 = vmatpush1.bf16.msra.mxu0 0
  %1353 = vmatprep.subr.bf16.mxu0 0
  %1354 = vmatpush1.bf16.msra.mxu0 0
  %1355 = vmatprep.subr.bf16.mxu0 0
  %1356 = vmatpush1.bf16.msra.mxu0 0
  %1357 = vmatprep.subr.bf16.mxu0 0
  %1358 = vmatpush1.bf16.msra.mxu0 0
  %1359 = vmatprep.subr.bf16.mxu0 0
  %1360 = vmatpush1.bf16.msra.mxu0 0
  %1361 = vmatprep.subr.bf16.mxu0 0
  %1362 = vmatpush1.bf16.msra.mxu0 %v1345
  %1363 = vmatprep.subr.bf16.mxu0 0
  %1364 = vmatpush2.bf16.msra.mxu0 0
  %1365 = vmatprep.subr.bf16.mxu0 0
  %1366 = vmatpush2.bf16.msra.mxu0 0
  %1367 = vmatprep.subr.bf16.mxu0 0
  %1368 = vmatpush2.bf16.msra.mxu0 0
  %1369 = vmatprep.subr.bf16.mxu0 0
  %1370 = vmatpush2.bf16.msra.mxu0 0
  %1371 = vmatprep.subr.bf16.mxu0 0
  %1372 = vmatpush2.bf16.msra.mxu0 0
  %1373 = vmatprep.subr.bf16.mxu0 0
  %1374 = vmatpush2.bf16.msra.mxu0 0
  %1375 = vmatprep.subr.bf16.mxu0 0
  %1376 = vmatpush2.bf16.msra.mxu0 0
  %1377 = vmatprep.subr.bf16.mxu0 0
  %1378 = vmatpush2.bf16.msra.mxu0 0
  %1379 = vmatprep.mubr.bf16.mxu0 0
  %1380 = vmatmul.mubr.bf16.gmra.mxu0 %v1342
  %v1381 = vpop.f32.mrf.mxu0
  %v1382 = vadd.f32 0.0, %v1381
  %v1383 = vpop.f32.mrf.mxu0
  %v1384 = vpop.f32.mrf.mxu0
  %v1385 = vadd.f32 0.0, %v1384
  %v1386 = vpop.f32.mrf.mxu0
  %1387 = vdwg.mxu0
  %v1388 = vadd.f32 %v1331, %v1382
  %v1389 = vadd.f32 %v1332, %v1385
  %1390 = vset.pattern.permute.xlu0 1
  %1391 = vperm.xlu0 %1390, %v30
  %v1392 = vpop.permute.xlu0 %1391
  %1395 = vset.pattern.permute.xlu0 1
  %1396 = vperm.xlu0 %1395, %v31
  %v1397 = vpop.permute.xlu0 %1396
  %v1399 = vadd.f32 %v1388, %v1392
  %v1400 = vadd.f32 %v1389, %v1397
  %v1401 = vmax.f32 %v1399, 0.0
  %v1402 = vmax.f32 %v1400, 0.0
  %vm1403 = vcmask 408576
  %v1404 = vsel %vm1403, %v1401, 0.0
  %1405 = vadd.xlane.f32.xlu0 %v1404
  %v1406 = vpop.xlane.xlu0 %1405
  %v1407 = vsel %vm1403, %v1402, 0.0
  %1408 = vadd.xlane.f32.xlu0 %v1407
  %v1409 = vpop.xlane.xlu0 %1408
  %v1410 = vmul.f32 %v1406, 0.02
  %v1411 = vmul.f32 %v1409, 0.02
  %v1412 = vmul.f32 %v1401, %v1401
  %v1413 = vmul.f32 %v1402, %v1402
  %v1414 = vsel %vm1403, %v1412, 0.0
  %1415 = vadd.xlane.f32.xlu0 %v1414
  %v1416 = vpop.xlane.xlu0 %1415
  %v1417 = vsel %vm1403, %v1413, 0.0
  %1418 = vadd.xlane.f32.xlu0 %v1417
  %v1419 = vpop.xlane.xlu0 %1418
  %v1420 = vmul.f32 %v1416, 0.02
  %v1421 = vmul.f32 %v1419, 0.02
  %v1422 = vmul.f32 %v1410, %v1410
  %v1423 = vmul.f32 %v1411, %v1411
  %v1424 = vsub.f32 %v1420, %v1422
  %v1425 = vsub.f32 %v1421, %v1423
  %v1426 = vmax.f32 %v1424, 0.0
  %v1427 = vmax.f32 %v1425, 0.0
  %v1428 = vadd.f32 %v1426, 1e-05
  %v1429 = vadd.f32 %v1427, 1e-05
  %v1430 = vrsqrt.pop %v1428
  %v1431 = vrsqrt.pop %v1429
  %1434 = vrot.lane.b32.xlu0 %v1401, 120
  %v1435 = vpop.permute.xlu0 %1434
  %1436 = vrot.lane.b32.xlu0 %v1402, 120
  %v1437 = vpop.permute.xlu0 %1436
  %v1440 = vmax.f32 %v1401, %v1435
  %v1441 = vmax.f32 %v1402, %v1437
  %1444 = vrot.lane.b32.xlu0 %v1440, 112
  %v1445 = vpop.permute.xlu0 %1444
  %1446 = vrot.lane.b32.xlu0 %v1441, 112
  %v1447 = vpop.permute.xlu0 %1446
  %v1450 = vmax.f32 %v1440, %v1445
  %v1451 = vmax.f32 %v1441, %v1447
  %v1452 = vsub.f32 %v1450, %v1410
  %v1453 = vsub.f32 %v1451, %v1411
  %v1454 = vmul.f32 %v1452, %v1430
  %v1455 = vmul.f32 %v1453, %v1431
  %v1456 = vpack.c.bf16 %v1455, %v1454
  %v1457 = vld [vmem:[%s4] sm:$0xf]
  %v1458 = vld [vmem:[%s4 + $0x4] sm:$0xf]
  %v1459 = vld [vmem:[%s4 + $0x8] sm:$0xf]
  %v1460 = vld [vmem:[%s4 + $0xc] sm:$0xf]
  %v1461 = vld [vmem:[%s4 + $0x10] sm:$0xf]
  %v1462 = vld [vmem:[%s4 + $0x14] sm:$0xf]
  %v1463 = vld [vmem:[%s4 + $0x18] sm:$0xf]
  %v1464 = vld [vmem:[%s4 + $0x1c] sm:$0xf]
  %v1465 = vld [vmem:[%s4 + $0x20] sm:$0xf]
  %v1466 = vld [vmem:[%s4 + $0x24] sm:$0xf]
  %v1467 = vld [vmem:[%s4 + $0x28] sm:$0xf]
  %v1468 = vld [vmem:[%s4 + $0x2c] sm:$0xf]
  %v1469 = vld [vmem:[%s4 + $0x30] sm:$0xf]
  %v1470 = vld [vmem:[%s4 + $0x34] sm:$0xf]
  %s1471 = scalar_lea.vmem %s4, 56
  %v1472 = vld [vmem:[%s1471] sm:$0xf]
  %v1473 = vld [vmem:[%s1471 + $0x4] sm:$0xf]
  %v1474 = vld [vmem:[%s1471 + $0x8] sm:$0xf]
  %v1475 = vld [vmem:[%s1471 + $0xc] sm:$0xf]
  %v1476 = vld [vmem:[%s1471 + $0x10] sm:$0xf]
  %v1477 = vld [vmem:[%s1471 + $0x14] sm:$0xf]
  %v1478 = vld [vmem:[%s1471 + $0x18] sm:$0xf]
  %v1479 = vld [vmem:[%s1471 + $0x1c] sm:$0xf]
  %v1480 = vld [vmem:[%s1471 + $0x20] sm:$0xf]
  %v1481 = vld [vmem:[%s1471 + $0x24] sm:$0xf]
  %v1482 = vld [vmem:[%s1471 + $0x28] sm:$0xf]
  %v1483 = vld [vmem:[%s1471 + $0x2c] sm:$0xf]
  %v1484 = vld [vmem:[%s1471 + $0x30] sm:$0xf]
  %v1485 = vld [vmem:[%s1471 + $0x34] sm:$0xf]
  %v1500 = vunpack.c.l.b16 %v1472
  %v1501 = vunpack.c.l.b16 %v1473
  %v1502 = vunpack.c.l.b16 %v1474
  %v1503 = vunpack.c.l.b16 %v1475
  %v1504 = vunpack.c.l.b16 %v1476
  %v1505 = vunpack.c.l.b16 %v1477
  %v1506 = vunpack.c.l.b16 %v1478
  %v1507 = vunpack.c.l.b16 %v1479
  %v1508 = vunpack.c.l.b16 %v1480
  %v1509 = vunpack.c.l.b16 %v1481
  %v1510 = vunpack.c.l.b16 %v1482
  %v1511 = vunpack.c.l.b16 %v1483
  %v1512 = vunpack.c.l.b16 %v1484
  %v1513 = vunpack.c.l.b16 %v1485
  %v1514 = vpack.c.b16 %v1501, %v1500
  %v1515 = vpack.c.b16 %v1503, %v1502
  %v1516 = vpack.c.b16 %v1505, %v1504
  %v1517 = vpack.c.b16 %v1507, %v1506
  %v1518 = vpack.c.b16 %v1509, %v1508
  %v1519 = vpack.c.b16 %v1511, %v1510
  %v1520 = vpack.c.b16 %v1513, %v1512
  %1522 = vrot.lane.b32.xlu0 %v1456, 126
  %v1523 = vpop.permute.xlu0 %1522
  %vm1525 = vcmask 130048
  %v1527 = vsel %vm1525, %v1514, 0
  %v1530 = vsel %vm1525, %v1515, 0
  %v1533 = vsel %vm1525, %v1516, 0
  %v1536 = vsel %vm1525, %v1517, 0
  %v1539 = vsel %vm1525, %v1518, 0
  %v1542 = vsel %vm1525, %v1519, 0
  %v1545 = vsel %vm1525, %v1520, 0
  %1547 = vmatprep.subr.bf16.mxu0 0
  %1548 = vmatpush1.bf16.msra.mxu0 0
  %1549 = vmatprep.subr.bf16.mxu0 0
  %1550 = vmatpush1.bf16.msra.mxu0 0
  %1551 = vmatprep.subr.bf16.mxu0 0
  %1552 = vmatpush1.bf16.msra.mxu0 0
  %1553 = vmatprep.subr.bf16.mxu0 0
  %1554 = vmatpush1.bf16.msra.mxu0 0
  %1555 = vmatprep.subr.bf16.mxu0 0
  %1556 = vmatpush1.bf16.msra.mxu0 0
  %1557 = vmatprep.subr.bf16.mxu0 0
  %1558 = vmatpush1.bf16.msra.mxu0 0
  %1559 = vmatprep.subr.bf16.mxu0 0
  %1560 = vmatpush1.bf16.msra.mxu0 0
  %1561 = vmatprep.subr.bf16.mxu0 0
  %1562 = vmatpush1.bf16.msra.mxu0 %v1523
  %1563 = vmatprep.subr.bf16.mxu0 0
  %1564 = vmatpush2.bf16.msra.mxu0 0
  %1565 = vmatprep.subr.bf16.mxu0 0
  %1566 = vmatpush2.bf16.msra.mxu0 0
  %1567 = vmatprep.subr.bf16.mxu0 0
  %1568 = vmatpush2.bf16.msra.mxu0 0
  %1569 = vmatprep.subr.bf16.mxu0 0
  %1570 = vmatpush2.bf16.msra.mxu0 0
  %1571 = vmatprep.subr.bf16.mxu0 0
  %1572 = vmatpush2.bf16.msra.mxu0 0
  %1573 = vmatprep.subr.bf16.mxu0 0
  %1574 = vmatpush2.bf16.msra.mxu0 0
  %1575 = vmatprep.subr.bf16.mxu0 0
  %1576 = vmatpush2.bf16.msra.mxu0 0
  %1577 = vmatprep.subr.bf16.mxu0 0
  %1578 = vmatpush2.bf16.msra.mxu0 0
  %1579 = vmatprep.mubr.bf16.mxu0 0
  %1580 = vmatmul.mubr.bf16.gmra.mxu0 %v1527
  %v1581 = vpop.f32.mrf.mxu0
  %v1582 = vadd.f32 0.0, %v1581
  %v1583 = vpop.f32.mrf.mxu0
  %v1584 = vpop.f32.mrf.mxu0
  %v1585 = vadd.f32 0.0, %v1584
  %v1586 = vpop.f32.mrf.mxu0
  %1587 = vmatprep.mubr.bf16.mxu0 0
  %1588 = vmatmul.mubr.bf16.gmra.mxu0 %v1530
  %v1589 = vpop.f32.mrf.mxu0
  %v1590 = vadd.f32 0.0, %v1589
  %v1591 = vpop.f32.mrf.mxu0
  %v1592 = vpop.f32.mrf.mxu0
  %v1593 = vadd.f32 0.0, %v1592
  %v1594 = vpop.f32.mrf.mxu0
  %1595 = vmatprep.mubr.bf16.mxu0 0
  %1596 = vmatmul.mubr.bf16.gmra.mxu0 %v1533
  %v1597 = vpop.f32.mrf.mxu0
  %v1598 = vadd.f32 0.0, %v1597
  %v1599 = vpop.f32.mrf.mxu0
  %v1600 = vpop.f32.mrf.mxu0
  %v1601 = vadd.f32 0.0, %v1600
  %v1602 = vpop.f32.mrf.mxu0
  %1603 = vmatprep.mubr.bf16.mxu0 0
  %1604 = vmatmul.mubr.bf16.gmra.mxu0 %v1536
  %v1605 = vpop.f32.mrf.mxu0
  %v1606 = vadd.f32 0.0, %v1605
  %v1607 = vpop.f32.mrf.mxu0
  %v1608 = vpop.f32.mrf.mxu0
  %v1609 = vadd.f32 0.0, %v1608
  %v1610 = vpop.f32.mrf.mxu0
  %1611 = vmatprep.mubr.bf16.mxu0 0
  %1612 = vmatmul.mubr.bf16.gmra.mxu0 %v1539
  %v1613 = vpop.f32.mrf.mxu0
  %v1614 = vadd.f32 0.0, %v1613
  %v1615 = vpop.f32.mrf.mxu0
  %v1616 = vpop.f32.mrf.mxu0
  %v1617 = vadd.f32 0.0, %v1616
  %v1618 = vpop.f32.mrf.mxu0
  %1619 = vmatprep.mubr.bf16.mxu0 0
  %1620 = vmatmul.mubr.bf16.gmra.mxu0 %v1542
  %v1621 = vpop.f32.mrf.mxu0
  %v1622 = vadd.f32 0.0, %v1621
  %v1623 = vpop.f32.mrf.mxu0
  %v1624 = vpop.f32.mrf.mxu0
  %v1625 = vadd.f32 0.0, %v1624
  %v1626 = vpop.f32.mrf.mxu0
  %1627 = vmatprep.mubr.bf16.mxu0 0
  %1628 = vmatmul.mubr.bf16.gmra.mxu0 %v1545
  %v1629 = vpop.f32.mrf.mxu0
  %v1630 = vadd.f32 0.0, %v1629
  %v1631 = vpop.f32.mrf.mxu0
  %v1632 = vpop.f32.mrf.mxu0
  %v1633 = vadd.f32 0.0, %v1632
  %v1634 = vpop.f32.mrf.mxu0
  %1635 = vdwg.mxu0
  %v1650 = vunpack.c.l.b16 %v1457
  %v1651 = vunpack.c.l.b16 %v1458
  %v1652 = vunpack.c.l.b16 %v1459
  %v1653 = vunpack.c.l.b16 %v1460
  %v1654 = vunpack.c.l.b16 %v1461
  %v1655 = vunpack.c.l.b16 %v1462
  %v1656 = vunpack.c.l.b16 %v1463
  %v1657 = vunpack.c.l.b16 %v1464
  %v1658 = vunpack.c.l.b16 %v1465
  %v1659 = vunpack.c.l.b16 %v1466
  %v1660 = vunpack.c.l.b16 %v1467
  %v1661 = vunpack.c.l.b16 %v1468
  %v1662 = vunpack.c.l.b16 %v1469
  %v1663 = vunpack.c.l.b16 %v1470
  %v1664 = vpack.c.b16 %v1651, %v1650
  %v1665 = vpack.c.b16 %v1653, %v1652
  %v1666 = vpack.c.b16 %v1655, %v1654
  %v1667 = vpack.c.b16 %v1657, %v1656
  %v1668 = vpack.c.b16 %v1659, %v1658
  %v1669 = vpack.c.b16 %v1661, %v1660
  %v1670 = vpack.c.b16 %v1663, %v1662
  %v1672 = vsel %vm1525, %v1664, 0
  %v1675 = vsel %vm1525, %v1665, 0
  %v1678 = vsel %vm1525, %v1666, 0
  %v1681 = vsel %vm1525, %v1667, 0
  %v1684 = vsel %vm1525, %v1668, 0
  %v1687 = vsel %vm1525, %v1669, 0
  %v1690 = vsel %vm1525, %v1670, 0
  %1692 = vmatprep.subr.bf16.mxu0 0
  %1693 = vmatpush1.bf16.msra.mxu0 0
  %1694 = vmatprep.subr.bf16.mxu0 0
  %1695 = vmatpush1.bf16.msra.mxu0 0
  %1696 = vmatprep.subr.bf16.mxu0 0
  %1697 = vmatpush1.bf16.msra.mxu0 0
  %1698 = vmatprep.subr.bf16.mxu0 0
  %1699 = vmatpush1.bf16.msra.mxu0 0
  %1700 = vmatprep.subr.bf16.mxu0 0
  %1701 = vmatpush1.bf16.msra.mxu0 0
  %1702 = vmatprep.subr.bf16.mxu0 0
  %1703 = vmatpush1.bf16.msra.mxu0 0
  %1704 = vmatprep.subr.bf16.mxu0 0
  %1705 = vmatpush1.bf16.msra.mxu0 0
  %1706 = vmatprep.subr.bf16.mxu0 0
  %1707 = vmatpush1.bf16.msra.mxu0 %v1456
  %1708 = vmatprep.subr.bf16.mxu0 0
  %1709 = vmatpush2.bf16.msra.mxu0 0
  %1710 = vmatprep.subr.bf16.mxu0 0
  %1711 = vmatpush2.bf16.msra.mxu0 0
  %1712 = vmatprep.subr.bf16.mxu0 0
  %1713 = vmatpush2.bf16.msra.mxu0 0
  %1714 = vmatprep.subr.bf16.mxu0 0
  %1715 = vmatpush2.bf16.msra.mxu0 0
  %1716 = vmatprep.subr.bf16.mxu0 0
  %1717 = vmatpush2.bf16.msra.mxu0 0
  %1718 = vmatprep.subr.bf16.mxu0 0
  %1719 = vmatpush2.bf16.msra.mxu0 0
  %1720 = vmatprep.subr.bf16.mxu0 0
  %1721 = vmatpush2.bf16.msra.mxu0 0
  %1722 = vmatprep.subr.bf16.mxu0 0
  %1723 = vmatpush2.bf16.msra.mxu0 0
  %1724 = vmatprep.mubr.bf16.mxu0 0
  %1725 = vmatmul.mubr.bf16.gmra.mxu0 %v1672
  %v1726 = vpop.f32.mrf.mxu0
  %v1727 = vadd.f32 %v1582, %v1726
  %v1728 = vpop.f32.mrf.mxu0
  %v1729 = vpop.f32.mrf.mxu0
  %v1730 = vadd.f32 %v1585, %v1729
  %v1731 = vpop.f32.mrf.mxu0
  %1732 = vmatprep.mubr.bf16.mxu0 0
  %1733 = vmatmul.mubr.bf16.gmra.mxu0 %v1675
  %v1734 = vpop.f32.mrf.mxu0
  %v1735 = vadd.f32 %v1590, %v1734
  %v1736 = vpop.f32.mrf.mxu0
  %v1737 = vpop.f32.mrf.mxu0
  %v1738 = vadd.f32 %v1593, %v1737
  %v1739 = vpop.f32.mrf.mxu0
  %1740 = vmatprep.mubr.bf16.mxu0 0
  %1741 = vmatmul.mubr.bf16.gmra.mxu0 %v1678
  %v1742 = vpop.f32.mrf.mxu0
  %v1743 = vadd.f32 %v1598, %v1742
  %v1744 = vpop.f32.mrf.mxu0
  %v1745 = vpop.f32.mrf.mxu0
  %v1746 = vadd.f32 %v1601, %v1745
  %v1747 = vpop.f32.mrf.mxu0
  %1748 = vmatprep.mubr.bf16.mxu0 0
  %1749 = vmatmul.mubr.bf16.gmra.mxu0 %v1681
  %v1750 = vpop.f32.mrf.mxu0
  %v1751 = vadd.f32 %v1606, %v1750
  %v1752 = vpop.f32.mrf.mxu0
  %v1753 = vpop.f32.mrf.mxu0
  %v1754 = vadd.f32 %v1609, %v1753
  %v1755 = vpop.f32.mrf.mxu0
  %1756 = vmatprep.mubr.bf16.mxu0 0
  %1757 = vmatmul.mubr.bf16.gmra.mxu0 %v1684
  %v1758 = vpop.f32.mrf.mxu0
  %v1759 = vadd.f32 %v1614, %v1758
  %v1760 = vpop.f32.mrf.mxu0
  %v1761 = vpop.f32.mrf.mxu0
  %v1762 = vadd.f32 %v1617, %v1761
  %v1763 = vpop.f32.mrf.mxu0
  %1764 = vmatprep.mubr.bf16.mxu0 0
  %1765 = vmatmul.mubr.bf16.gmra.mxu0 %v1687
  %v1766 = vpop.f32.mrf.mxu0
  %v1767 = vadd.f32 %v1622, %v1766
  %v1768 = vpop.f32.mrf.mxu0
  %v1769 = vpop.f32.mrf.mxu0
  %v1770 = vadd.f32 %v1625, %v1769
  %v1771 = vpop.f32.mrf.mxu0
  %1772 = vmatprep.mubr.bf16.mxu0 0
  %1773 = vmatmul.mubr.bf16.gmra.mxu0 %v1690
  %v1774 = vpop.f32.mrf.mxu0
  %v1775 = vadd.f32 %v1630, %v1774
  %v1776 = vpop.f32.mrf.mxu0
  %v1777 = vpop.f32.mrf.mxu0
  %v1778 = vadd.f32 %v1633, %v1777
  %v1779 = vpop.f32.mrf.mxu0
  %1780 = vdwg.mxu0
  %s1781 = scalar_lea.vmem %s4, 112
  %v1782 = vld [vmem:[%s1781] sm:$0xf]
  %v1783 = vld [vmem:[%s1781 + $0x4] sm:$0xf]
  %v1784 = vld [vmem:[%s1781 + $0x8] sm:$0xf]
  %v1785 = vld [vmem:[%s1781 + $0xc] sm:$0xf]
  %v1786 = vld [vmem:[%s1781 + $0x10] sm:$0xf]
  %v1787 = vld [vmem:[%s1781 + $0x14] sm:$0xf]
  %v1788 = vld [vmem:[%s1781 + $0x18] sm:$0xf]
  %v1789 = vld [vmem:[%s1781 + $0x1c] sm:$0xf]
  %v1790 = vld [vmem:[%s1781 + $0x20] sm:$0xf]
  %v1791 = vld [vmem:[%s1781 + $0x24] sm:$0xf]
  %v1792 = vld [vmem:[%s1781 + $0x28] sm:$0xf]
  %v1793 = vld [vmem:[%s1781 + $0x2c] sm:$0xf]
  %v1794 = vld [vmem:[%s1781 + $0x30] sm:$0xf]
  %v1795 = vld [vmem:[%s1781 + $0x34] sm:$0xf]
  %v1810 = vunpack.c.l.b16 %v1782
  %v1811 = vunpack.c.l.b16 %v1783
  %v1812 = vunpack.c.l.b16 %v1784
  %v1813 = vunpack.c.l.b16 %v1785
  %v1814 = vunpack.c.l.b16 %v1786
  %v1815 = vunpack.c.l.b16 %v1787
  %v1816 = vunpack.c.l.b16 %v1788
  %v1817 = vunpack.c.l.b16 %v1789
  %v1818 = vunpack.c.l.b16 %v1790
  %v1819 = vunpack.c.l.b16 %v1791
  %v1820 = vunpack.c.l.b16 %v1792
  %v1821 = vunpack.c.l.b16 %v1793
  %v1822 = vunpack.c.l.b16 %v1794
  %v1823 = vunpack.c.l.b16 %v1795
  %v1824 = vpack.c.b16 %v1811, %v1810
  %v1825 = vpack.c.b16 %v1813, %v1812
  %v1826 = vpack.c.b16 %v1815, %v1814
  %v1827 = vpack.c.b16 %v1817, %v1816
  %v1828 = vpack.c.b16 %v1819, %v1818
  %v1829 = vpack.c.b16 %v1821, %v1820
  %v1830 = vpack.c.b16 %v1823, %v1822
  %1831 = vrot.lane.b32.xlu0 %v1456, 124
  %v1832 = vpop.permute.xlu0 %1831
  %v1835 = vsel %vm1525, %v1824, 0
  %v1838 = vsel %vm1525, %v1825, 0
  %v1841 = vsel %vm1525, %v1826, 0
  %v1844 = vsel %vm1525, %v1827, 0
  %v1847 = vsel %vm1525, %v1828, 0
  %v1850 = vsel %vm1525, %v1829, 0
  %v1853 = vsel %vm1525, %v1830, 0
  %1855 = vmatprep.subr.bf16.mxu0 0
  %1856 = vmatpush1.bf16.msra.mxu0 0
  %1857 = vmatprep.subr.bf16.mxu0 0
  %1858 = vmatpush1.bf16.msra.mxu0 0
  %1859 = vmatprep.subr.bf16.mxu0 0
  %1860 = vmatpush1.bf16.msra.mxu0 0
  %1861 = vmatprep.subr.bf16.mxu0 0
  %1862 = vmatpush1.bf16.msra.mxu0 0
  %1863 = vmatprep.subr.bf16.mxu0 0
  %1864 = vmatpush1.bf16.msra.mxu0 0
  %1865 = vmatprep.subr.bf16.mxu0 0
  %1866 = vmatpush1.bf16.msra.mxu0 0
  %1867 = vmatprep.subr.bf16.mxu0 0
  %1868 = vmatpush1.bf16.msra.mxu0 0
  %1869 = vmatprep.subr.bf16.mxu0 0
  %1870 = vmatpush1.bf16.msra.mxu0 %v1832
  %1871 = vmatprep.subr.bf16.mxu0 0
  %1872 = vmatpush2.bf16.msra.mxu0 0
  %1873 = vmatprep.subr.bf16.mxu0 0
  %1874 = vmatpush2.bf16.msra.mxu0 0
  %1875 = vmatprep.subr.bf16.mxu0 0
  %1876 = vmatpush2.bf16.msra.mxu0 0
  %1877 = vmatprep.subr.bf16.mxu0 0
  %1878 = vmatpush2.bf16.msra.mxu0 0
  %1879 = vmatprep.subr.bf16.mxu0 0
  %1880 = vmatpush2.bf16.msra.mxu0 0
  %1881 = vmatprep.subr.bf16.mxu0 0
  %1882 = vmatpush2.bf16.msra.mxu0 0
  %1883 = vmatprep.subr.bf16.mxu0 0
  %1884 = vmatpush2.bf16.msra.mxu0 0
  %1885 = vmatprep.subr.bf16.mxu0 0
  %1886 = vmatpush2.bf16.msra.mxu0 0
  %1887 = vmatprep.mubr.bf16.mxu0 0
  %1888 = vmatmul.mubr.bf16.gmra.mxu0 %v1835
  %v1889 = vpop.f32.mrf.mxu0
  %v1890 = vadd.f32 0.0, %v1889
  %v1891 = vpop.f32.mrf.mxu0
  %v1892 = vpop.f32.mrf.mxu0
  %v1893 = vadd.f32 0.0, %v1892
  %v1894 = vpop.f32.mrf.mxu0
  %1895 = vmatprep.mubr.bf16.mxu0 0
  %1896 = vmatmul.mubr.bf16.gmra.mxu0 %v1838
  %v1897 = vpop.f32.mrf.mxu0
  %v1898 = vadd.f32 0.0, %v1897
  %v1899 = vpop.f32.mrf.mxu0
  %v1900 = vpop.f32.mrf.mxu0
  %v1901 = vadd.f32 0.0, %v1900
  %v1902 = vpop.f32.mrf.mxu0
  %1903 = vmatprep.mubr.bf16.mxu0 0
  %1904 = vmatmul.mubr.bf16.gmra.mxu0 %v1841
  %v1905 = vpop.f32.mrf.mxu0
  %v1906 = vadd.f32 0.0, %v1905
  %v1907 = vpop.f32.mrf.mxu0
  %v1908 = vpop.f32.mrf.mxu0
  %v1909 = vadd.f32 0.0, %v1908
  %v1910 = vpop.f32.mrf.mxu0
  %1911 = vmatprep.mubr.bf16.mxu0 0
  %1912 = vmatmul.mubr.bf16.gmra.mxu0 %v1844
  %v1913 = vpop.f32.mrf.mxu0
  %v1914 = vadd.f32 0.0, %v1913
  %v1915 = vpop.f32.mrf.mxu0
  %v1916 = vpop.f32.mrf.mxu0
  %v1917 = vadd.f32 0.0, %v1916
  %v1918 = vpop.f32.mrf.mxu0
  %1919 = vmatprep.mubr.bf16.mxu0 0
  %1920 = vmatmul.mubr.bf16.gmra.mxu0 %v1847
  %v1921 = vpop.f32.mrf.mxu0
  %v1922 = vadd.f32 0.0, %v1921
  %v1923 = vpop.f32.mrf.mxu0
  %v1924 = vpop.f32.mrf.mxu0
  %v1925 = vadd.f32 0.0, %v1924
  %v1926 = vpop.f32.mrf.mxu0
  %1927 = vmatprep.mubr.bf16.mxu0 0
  %1928 = vmatmul.mubr.bf16.gmra.mxu0 %v1850
  %v1929 = vpop.f32.mrf.mxu0
  %v1930 = vadd.f32 0.0, %v1929
  %v1931 = vpop.f32.mrf.mxu0
  %v1932 = vpop.f32.mrf.mxu0
  %v1933 = vadd.f32 0.0, %v1932
  %v1934 = vpop.f32.mrf.mxu0
  %1935 = vmatprep.mubr.bf16.mxu0 0
  %1936 = vmatmul.mubr.bf16.gmra.mxu0 %v1853
  %v1937 = vpop.f32.mrf.mxu0
  %v1938 = vadd.f32 0.0, %v1937
  %v1939 = vpop.f32.mrf.mxu0
  %v1940 = vpop.f32.mrf.mxu0
  %v1941 = vadd.f32 0.0, %v1940
  %v1942 = vpop.f32.mrf.mxu0
  %1943 = vdwg.mxu0
  %v1944 = vadd.f32 %v1727, %v1890
  %v1945 = vadd.f32 %v1730, %v1893
  %v1946 = vadd.f32 %v1735, %v1898
  %v1947 = vadd.f32 %v1738, %v1901
  %v1948 = vadd.f32 %v1743, %v1906
  %v1949 = vadd.f32 %v1746, %v1909
  %v1950 = vadd.f32 %v1751, %v1914
  %v1951 = vadd.f32 %v1754, %v1917
  %v1952 = vadd.f32 %v1759, %v1922
  %v1953 = vadd.f32 %v1762, %v1925
  %v1954 = vadd.f32 %v1767, %v1930
  %v1955 = vadd.f32 %v1770, %v1933
  %v1956 = vadd.f32 %v1775, %v1938
  %v1957 = vadd.f32 %v1778, %v1941
  %s1958 = scalar_lea.vmem %s4, 168
  %v1959 = vld [vmem:[%s1958] sm:$0xf]
  %v1960 = vld [vmem:[%s1958 + $0x4] sm:$0xf]
  %v1961 = vld [vmem:[%s1958 + $0x8] sm:$0xf]
  %v1962 = vld [vmem:[%s1958 + $0xc] sm:$0xf]
  %v1963 = vld [vmem:[%s1958 + $0x10] sm:$0xf]
  %v1964 = vld [vmem:[%s1958 + $0x14] sm:$0xf]
  %v1965 = vld [vmem:[%s1958 + $0x18] sm:$0xf]
  %v1966 = vld [vmem:[%s1958 + $0x1c] sm:$0xf]
  %v1967 = vld [vmem:[%s1958 + $0x20] sm:$0xf]
  %v1968 = vld [vmem:[%s1958 + $0x24] sm:$0xf]
  %v1969 = vld [vmem:[%s1958 + $0x28] sm:$0xf]
  %v1970 = vld [vmem:[%s1958 + $0x2c] sm:$0xf]
  %v1971 = vld [vmem:[%s1958 + $0x30] sm:$0xf]
  %v1972 = vld [vmem:[%s1958 + $0x34] sm:$0xf]
  %v1987 = vunpack.c.l.b16 %v1959
  %v1988 = vunpack.c.l.b16 %v1960
  %v1989 = vunpack.c.l.b16 %v1961
  %v1990 = vunpack.c.l.b16 %v1962
  %v1991 = vunpack.c.l.b16 %v1963
  %v1992 = vunpack.c.l.b16 %v1964
  %v1993 = vunpack.c.l.b16 %v1965
  %v1994 = vunpack.c.l.b16 %v1966
  %v1995 = vunpack.c.l.b16 %v1967
  %v1996 = vunpack.c.l.b16 %v1968
  %v1997 = vunpack.c.l.b16 %v1969
  %v1998 = vunpack.c.l.b16 %v1970
  %v1999 = vunpack.c.l.b16 %v1971
  %v2000 = vunpack.c.l.b16 %v1972
  %v2001 = vpack.c.b16 %v1988, %v1987
  %v2002 = vpack.c.b16 %v1990, %v1989
  %v2003 = vpack.c.b16 %v1992, %v1991
  %v2004 = vpack.c.b16 %v1994, %v1993
  %v2005 = vpack.c.b16 %v1996, %v1995
  %v2006 = vpack.c.b16 %v1998, %v1997
  %v2007 = vpack.c.b16 %v2000, %v1999
  %2008 = vrot.lane.b32.xlu0 %v1456, 122
  %v2009 = vpop.permute.xlu0 %2008
  %v2012 = vsel %vm1525, %v2001, 0
  %v2015 = vsel %vm1525, %v2002, 0
  %v2018 = vsel %vm1525, %v2003, 0
  %v2021 = vsel %vm1525, %v2004, 0
  %v2024 = vsel %vm1525, %v2005, 0
  %v2027 = vsel %vm1525, %v2006, 0
  %v2030 = vsel %vm1525, %v2007, 0
  %2032 = vmatprep.subr.bf16.mxu0 0
  %2033 = vmatpush1.bf16.msra.mxu0 0
  %2034 = vmatprep.subr.bf16.mxu0 0
  %2035 = vmatpush1.bf16.msra.mxu0 0
  %2036 = vmatprep.subr.bf16.mxu0 0
  %2037 = vmatpush1.bf16.msra.mxu0 0
  %2038 = vmatprep.subr.bf16.mxu0 0
  %2039 = vmatpush1.bf16.msra.mxu0 0
  %2040 = vmatprep.subr.bf16.mxu0 0
  %2041 = vmatpush1.bf16.msra.mxu0 0
  %2042 = vmatprep.subr.bf16.mxu0 0
  %2043 = vmatpush1.bf16.msra.mxu0 0
  %2044 = vmatprep.subr.bf16.mxu0 0
  %2045 = vmatpush1.bf16.msra.mxu0 0
  %2046 = vmatprep.subr.bf16.mxu0 0
  %2047 = vmatpush1.bf16.msra.mxu0 %v2009
  %2048 = vmatprep.subr.bf16.mxu0 0
  %2049 = vmatpush2.bf16.msra.mxu0 0
  %2050 = vmatprep.subr.bf16.mxu0 0
  %2051 = vmatpush2.bf16.msra.mxu0 0
  %2052 = vmatprep.subr.bf16.mxu0 0
  %2053 = vmatpush2.bf16.msra.mxu0 0
  %2054 = vmatprep.subr.bf16.mxu0 0
  %2055 = vmatpush2.bf16.msra.mxu0 0
  %2056 = vmatprep.subr.bf16.mxu0 0
  %2057 = vmatpush2.bf16.msra.mxu0 0
  %2058 = vmatprep.subr.bf16.mxu0 0
  %2059 = vmatpush2.bf16.msra.mxu0 0
  %2060 = vmatprep.subr.bf16.mxu0 0
  %2061 = vmatpush2.bf16.msra.mxu0 0
  %2062 = vmatprep.subr.bf16.mxu0 0
  %2063 = vmatpush2.bf16.msra.mxu0 0
  %2064 = vmatprep.mubr.bf16.mxu0 0
  %2065 = vmatmul.mubr.bf16.gmra.mxu0 %v2012
  %v2066 = vpop.f32.mrf.mxu0
  %v2067 = vadd.f32 0.0, %v2066
  %v2068 = vpop.f32.mrf.mxu0
  %v2069 = vpop.f32.mrf.mxu0
  %v2070 = vadd.f32 0.0, %v2069
  %v2071 = vpop.f32.mrf.mxu0
  %2072 = vmatprep.mubr.bf16.mxu0 0
  %2073 = vmatmul.mubr.bf16.gmra.mxu0 %v2015
  %v2074 = vpop.f32.mrf.mxu0
  %v2075 = vadd.f32 0.0, %v2074
  %v2076 = vpop.f32.mrf.mxu0
  %v2077 = vpop.f32.mrf.mxu0
  %v2078 = vadd.f32 0.0, %v2077
  %v2079 = vpop.f32.mrf.mxu0
  %2080 = vmatprep.mubr.bf16.mxu0 0
  %2081 = vmatmul.mubr.bf16.gmra.mxu0 %v2018
  %v2082 = vpop.f32.mrf.mxu0
  %v2083 = vadd.f32 0.0, %v2082
  %v2084 = vpop.f32.mrf.mxu0
  %v2085 = vpop.f32.mrf.mxu0
  %v2086 = vadd.f32 0.0, %v2085
  %v2087 = vpop.f32.mrf.mxu0
  %2088 = vmatprep.mubr.bf16.mxu0 0
  %2089 = vmatmul.mubr.bf16.gmra.mxu0 %v2021
  %v2090 = vpop.f32.mrf.mxu0
  %v2091 = vadd.f32 0.0, %v2090
  %v2092 = vpop.f32.mrf.mxu0
  %v2093 = vpop.f32.mrf.mxu0
  %v2094 = vadd.f32 0.0, %v2093
  %v2095 = vpop.f32.mrf.mxu0
  %2096 = vmatprep.mubr.bf16.mxu0 0
  %2097 = vmatmul.mubr.bf16.gmra.mxu0 %v2024
  %v2098 = vpop.f32.mrf.mxu0
  %v2099 = vadd.f32 0.0, %v2098
  %v2100 = vpop.f32.mrf.mxu0
  %v2101 = vpop.f32.mrf.mxu0
  %v2102 = vadd.f32 0.0, %v2101
  %v2103 = vpop.f32.mrf.mxu0
  %2104 = vmatprep.mubr.bf16.mxu0 0
  %2105 = vmatmul.mubr.bf16.gmra.mxu0 %v2027
  %v2106 = vpop.f32.mrf.mxu0
  %v2107 = vadd.f32 0.0, %v2106
  %v2108 = vpop.f32.mrf.mxu0
  %v2109 = vpop.f32.mrf.mxu0
  %v2110 = vadd.f32 0.0, %v2109
  %v2111 = vpop.f32.mrf.mxu0
  %2112 = vmatprep.mubr.bf16.mxu0 0
  %2113 = vmatmul.mubr.bf16.gmra.mxu0 %v2030
  %v2114 = vpop.f32.mrf.mxu0
  %v2115 = vadd.f32 0.0, %v2114
  %v2116 = vpop.f32.mrf.mxu0
  %v2117 = vpop.f32.mrf.mxu0
  %v2118 = vadd.f32 0.0, %v2117
  %v2119 = vpop.f32.mrf.mxu0
  %2120 = vdwg.mxu0
  %v2121 = vadd.f32 %v1944, %v2067
  %v2122 = vadd.f32 %v1945, %v2070
  %v2123 = vadd.f32 %v1946, %v2075
  %v2124 = vadd.f32 %v1947, %v2078
  %v2125 = vadd.f32 %v1948, %v2083
  %v2126 = vadd.f32 %v1949, %v2086
  %v2127 = vadd.f32 %v1950, %v2091
  %v2128 = vadd.f32 %v1951, %v2094
  %v2129 = vadd.f32 %v1952, %v2099
  %v2130 = vadd.f32 %v1953, %v2102
  %v2131 = vadd.f32 %v1954, %v2107
  %v2132 = vadd.f32 %v1955, %v2110
  %v2133 = vadd.f32 %v1956, %v2115
  %v2134 = vadd.f32 %v1957, %v2118
  %2135 = vset.pattern.permute.xlu0 2
  %2136 = vperm.xlu0 %2135, %v30
  %v2137 = vpop.permute.xlu0 %2136
  %2139 = vset.pattern.permute.xlu0 2
  %2140 = vperm.xlu0 %2139, %v31
  %v2141 = vpop.permute.xlu0 %2140
  %2144 = vset.pattern.permute.xlu0 2
  %2145 = vperm.xlu0 %2144, %v32
  %v2146 = vpop.permute.xlu0 %2145
  %2149 = vset.pattern.permute.xlu0 2
  %2150 = vperm.xlu0 %2149, %v33
  %v2151 = vpop.permute.xlu0 %2150
  %2154 = vset.pattern.permute.xlu0 2
  %2155 = vperm.xlu0 %2154, %v34
  %v2156 = vpop.permute.xlu0 %2155
  %2159 = vset.pattern.permute.xlu0 2
  %2160 = vperm.xlu0 %2159, %v35
  %v2161 = vpop.permute.xlu0 %2160
  %2164 = vset.pattern.permute.xlu0 2
  %2165 = vperm.xlu0 %2164, %v36
  %v2166 = vpop.permute.xlu0 %2165
  %2169 = vset.pattern.permute.xlu0 2
  %2170 = vperm.xlu0 %2169, %v37
  %v2171 = vpop.permute.xlu0 %2170
  %2174 = vset.pattern.permute.xlu0 2
  %2175 = vperm.xlu0 %2174, %v38
  %v2176 = vpop.permute.xlu0 %2175
  %2179 = vset.pattern.permute.xlu0 2
  %2180 = vperm.xlu0 %2179, %v39
  %v2181 = vpop.permute.xlu0 %2180
  %2184 = vset.pattern.permute.xlu0 2
  %2185 = vperm.xlu0 %2184, %v40
  %v2186 = vpop.permute.xlu0 %2185
  %2189 = vset.pattern.permute.xlu0 2
  %2190 = vperm.xlu0 %2189, %v41
  %v2191 = vpop.permute.xlu0 %2190
  %2194 = vset.pattern.permute.xlu0 2
  %2195 = vperm.xlu0 %2194, %v42
  %v2196 = vpop.permute.xlu0 %2195
  %2199 = vset.pattern.permute.xlu0 2
  %2200 = vperm.xlu0 %2199, %v43
  %v2201 = vpop.permute.xlu0 %2200
  %v2203 = vadd.f32 %v2121, %v2137
  %v2204 = vadd.f32 %v2122, %v2141
  %v2205 = vadd.f32 %v2123, %v2146
  %v2206 = vadd.f32 %v2124, %v2151
  %v2207 = vadd.f32 %v2125, %v2156
  %v2208 = vadd.f32 %v2126, %v2161
  %v2209 = vadd.f32 %v2127, %v2166
  %v2210 = vadd.f32 %v2128, %v2171
  %v2211 = vadd.f32 %v2129, %v2176
  %v2212 = vadd.f32 %v2130, %v2181
  %v2213 = vadd.f32 %v2131, %v2186
  %v2214 = vadd.f32 %v2132, %v2191
  %v2215 = vadd.f32 %v2133, %v2196
  %v2216 = vadd.f32 %v2134, %v2201
  %v2217 = vmax.f32 %v2203, 0.0
  %v2218 = vmax.f32 %v2204, 0.0
  %v2219 = vmax.f32 %v2205, 0.0
  %v2220 = vmax.f32 %v2206, 0.0
  %v2221 = vmax.f32 %v2207, 0.0
  %v2222 = vmax.f32 %v2208, 0.0
  %v2223 = vmax.f32 %v2209, 0.0
  %v2224 = vmax.f32 %v2210, 0.0
  %v2225 = vmax.f32 %v2211, 0.0
  %v2226 = vmax.f32 %v2212, 0.0
  %v2227 = vmax.f32 %v2213, 0.0
  %v2228 = vmax.f32 %v2214, 0.0
  %v2229 = vmax.f32 %v2215, 0.0
  %v2230 = vmax.f32 %v2216, 0.0
  %vm2231 = vcmask 15360
  %v2232 = vsel %vm2231, %v2217, 0.0
  %2233 = vadd.xlane.f32.xlu0 %v2232
  %v2234 = vpop.xlane.xlu0 %2233
  %v2235 = vsel %vm2231, %v2218, 0.0
  %2236 = vadd.xlane.f32.xlu0 %v2235
  %v2237 = vpop.xlane.xlu0 %2236
  %v2238 = vsel %vm2231, %v2219, 0.0
  %2239 = vadd.xlane.f32.xlu0 %v2238
  %v2240 = vpop.xlane.xlu0 %2239
  %v2241 = vsel %vm2231, %v2220, 0.0
  %2242 = vadd.xlane.f32.xlu0 %v2241
  %v2243 = vpop.xlane.xlu0 %2242
  %v2244 = vsel %vm2231, %v2221, 0.0
  %2245 = vadd.xlane.f32.xlu0 %v2244
  %v2246 = vpop.xlane.xlu0 %2245
  %v2247 = vsel %vm2231, %v2222, 0.0
  %2248 = vadd.xlane.f32.xlu0 %v2247
  %v2249 = vpop.xlane.xlu0 %2248
  %v2250 = vsel %vm2231, %v2223, 0.0
  %2251 = vadd.xlane.f32.xlu0 %v2250
  %v2252 = vpop.xlane.xlu0 %2251
  %v2253 = vsel %vm2231, %v2224, 0.0
  %2254 = vadd.xlane.f32.xlu0 %v2253
  %v2255 = vpop.xlane.xlu0 %2254
  %v2256 = vsel %vm2231, %v2225, 0.0
  %2257 = vadd.xlane.f32.xlu0 %v2256
  %v2258 = vpop.xlane.xlu0 %2257
  %v2259 = vsel %vm2231, %v2226, 0.0
  %2260 = vadd.xlane.f32.xlu0 %v2259
  %v2261 = vpop.xlane.xlu0 %2260
  %v2262 = vsel %vm2231, %v2227, 0.0
  %2263 = vadd.xlane.f32.xlu0 %v2262
  %v2264 = vpop.xlane.xlu0 %2263
  %v2265 = vsel %vm2231, %v2228, 0.0
  %2266 = vadd.xlane.f32.xlu0 %v2265
  %v2267 = vpop.xlane.xlu0 %2266
  %v2268 = vsel %vm2231, %v2229, 0.0
  %2269 = vadd.xlane.f32.xlu0 %v2268
  %v2270 = vpop.xlane.xlu0 %2269
  %v2271 = vsel %vm2231, %v2230, 0.0
  %2272 = vadd.xlane.f32.xlu0 %v2271
  %v2273 = vpop.xlane.xlu0 %2272
  %v2274 = vmul.f32 %v2234, 0.5
  %v2275 = vmul.f32 %v2237, 0.5
  %v2276 = vmul.f32 %v2240, 0.5
  %v2277 = vmul.f32 %v2243, 0.5
  %v2278 = vmul.f32 %v2246, 0.5
  %v2279 = vmul.f32 %v2249, 0.5
  %v2280 = vmul.f32 %v2252, 0.5
  %v2281 = vmul.f32 %v2255, 0.5
  %v2282 = vmul.f32 %v2258, 0.5
  %v2283 = vmul.f32 %v2261, 0.5
  %v2284 = vmul.f32 %v2264, 0.5
  %v2285 = vmul.f32 %v2267, 0.5
  %v2286 = vmul.f32 %v2270, 0.5
  %v2287 = vmul.f32 %v2273, 0.5
  %v2288 = vmul.f32 %v2217, %v2217
  %v2289 = vmul.f32 %v2218, %v2218
  %v2290 = vmul.f32 %v2219, %v2219
  %v2291 = vmul.f32 %v2220, %v2220
  %v2292 = vmul.f32 %v2221, %v2221
  %v2293 = vmul.f32 %v2222, %v2222
  %v2294 = vmul.f32 %v2223, %v2223
  %v2295 = vmul.f32 %v2224, %v2224
  %v2296 = vmul.f32 %v2225, %v2225
  %v2297 = vmul.f32 %v2226, %v2226
  %v2298 = vmul.f32 %v2227, %v2227
  %v2299 = vmul.f32 %v2228, %v2228
  %v2300 = vmul.f32 %v2229, %v2229
  %v2301 = vmul.f32 %v2230, %v2230
  %v2302 = vsel %vm2231, %v2288, 0.0
  %2303 = vadd.xlane.f32.xlu0 %v2302
  %v2304 = vpop.xlane.xlu0 %2303
  %v2305 = vsel %vm2231, %v2289, 0.0
  %2306 = vadd.xlane.f32.xlu0 %v2305
  %v2307 = vpop.xlane.xlu0 %2306
  %v2308 = vsel %vm2231, %v2290, 0.0
  %2309 = vadd.xlane.f32.xlu0 %v2308
  %v2310 = vpop.xlane.xlu0 %2309
  %v2311 = vsel %vm2231, %v2291, 0.0
  %2312 = vadd.xlane.f32.xlu0 %v2311
  %v2313 = vpop.xlane.xlu0 %2312
  %v2314 = vsel %vm2231, %v2292, 0.0
  %2315 = vadd.xlane.f32.xlu0 %v2314
  %v2316 = vpop.xlane.xlu0 %2315
  %v2317 = vsel %vm2231, %v2293, 0.0
  %2318 = vadd.xlane.f32.xlu0 %v2317
  %v2319 = vpop.xlane.xlu0 %2318
  %v2320 = vsel %vm2231, %v2294, 0.0
  %2321 = vadd.xlane.f32.xlu0 %v2320
  %v2322 = vpop.xlane.xlu0 %2321
  %v2323 = vsel %vm2231, %v2295, 0.0
  %2324 = vadd.xlane.f32.xlu0 %v2323
  %v2325 = vpop.xlane.xlu0 %2324
  %v2326 = vsel %vm2231, %v2296, 0.0
  %2327 = vadd.xlane.f32.xlu0 %v2326
  %v2328 = vpop.xlane.xlu0 %2327
  %v2329 = vsel %vm2231, %v2297, 0.0
  %2330 = vadd.xlane.f32.xlu0 %v2329
  %v2331 = vpop.xlane.xlu0 %2330
  %v2332 = vsel %vm2231, %v2298, 0.0
  %2333 = vadd.xlane.f32.xlu0 %v2332
  %v2334 = vpop.xlane.xlu0 %2333
  %v2335 = vsel %vm2231, %v2299, 0.0
  %2336 = vadd.xlane.f32.xlu0 %v2335
  %v2337 = vpop.xlane.xlu0 %2336
  %v2338 = vsel %vm2231, %v2300, 0.0
  %2339 = vadd.xlane.f32.xlu0 %v2338
  %v2340 = vpop.xlane.xlu0 %2339
  %v2341 = vsel %vm2231, %v2301, 0.0
  %2342 = vadd.xlane.f32.xlu0 %v2341
  %v2343 = vpop.xlane.xlu0 %2342
  %v2344 = vmul.f32 %v2304, 0.5
  %v2345 = vmul.f32 %v2307, 0.5
  %v2346 = vmul.f32 %v2310, 0.5
  %v2347 = vmul.f32 %v2313, 0.5
  %v2348 = vmul.f32 %v2316, 0.5
  %v2349 = vmul.f32 %v2319, 0.5
  %v2350 = vmul.f32 %v2322, 0.5
  %v2351 = vmul.f32 %v2325, 0.5
  %v2352 = vmul.f32 %v2328, 0.5
  %v2353 = vmul.f32 %v2331, 0.5
  %v2354 = vmul.f32 %v2334, 0.5
  %v2355 = vmul.f32 %v2337, 0.5
  %v2356 = vmul.f32 %v2340, 0.5
  %v2357 = vmul.f32 %v2343, 0.5
  %v2358 = vmul.f32 %v2274, %v2274
  %v2359 = vmul.f32 %v2275, %v2275
  %v2360 = vmul.f32 %v2276, %v2276
  %v2361 = vmul.f32 %v2277, %v2277
  %v2362 = vmul.f32 %v2278, %v2278
  %v2363 = vmul.f32 %v2279, %v2279
  %v2364 = vmul.f32 %v2280, %v2280
  %v2365 = vmul.f32 %v2281, %v2281
  %v2366 = vmul.f32 %v2282, %v2282
  %v2367 = vmul.f32 %v2283, %v2283
  %v2368 = vmul.f32 %v2284, %v2284
  %v2369 = vmul.f32 %v2285, %v2285
  %v2370 = vmul.f32 %v2286, %v2286
  %v2371 = vmul.f32 %v2287, %v2287
  %v2372 = vsub.f32 %v2344, %v2358
  %v2373 = vsub.f32 %v2345, %v2359
  %v2374 = vsub.f32 %v2346, %v2360
  %v2375 = vsub.f32 %v2347, %v2361
  %v2376 = vsub.f32 %v2348, %v2362
  %v2377 = vsub.f32 %v2349, %v2363
  %v2378 = vsub.f32 %v2350, %v2364
  %v2379 = vsub.f32 %v2351, %v2365
  %v2380 = vsub.f32 %v2352, %v2366
  %v2381 = vsub.f32 %v2353, %v2367
  %v2382 = vsub.f32 %v2354, %v2368
  %v2383 = vsub.f32 %v2355, %v2369
  %v2384 = vsub.f32 %v2356, %v2370
  %v2385 = vsub.f32 %v2357, %v2371
  %v2386 = vmax.f32 %v2372, 0.0
  %v2387 = vmax.f32 %v2373, 0.0
  %v2388 = vmax.f32 %v2374, 0.0
  %v2389 = vmax.f32 %v2375, 0.0
  %v2390 = vmax.f32 %v2376, 0.0
  %v2391 = vmax.f32 %v2377, 0.0
  %v2392 = vmax.f32 %v2378, 0.0
  %v2393 = vmax.f32 %v2379, 0.0
  %v2394 = vmax.f32 %v2380, 0.0
  %v2395 = vmax.f32 %v2381, 0.0
  %v2396 = vmax.f32 %v2382, 0.0
  %v2397 = vmax.f32 %v2383, 0.0
  %v2398 = vmax.f32 %v2384, 0.0
  %v2399 = vmax.f32 %v2385, 0.0
  %v2400 = vadd.f32 %v2386, 1e-05
  %v2401 = vadd.f32 %v2387, 1e-05
  %v2402 = vadd.f32 %v2388, 1e-05
  %v2403 = vadd.f32 %v2389, 1e-05
  %v2404 = vadd.f32 %v2390, 1e-05
  %v2405 = vadd.f32 %v2391, 1e-05
  %v2406 = vadd.f32 %v2392, 1e-05
  %v2407 = vadd.f32 %v2393, 1e-05
  %v2408 = vadd.f32 %v2394, 1e-05
  %v2409 = vadd.f32 %v2395, 1e-05
  %v2410 = vadd.f32 %v2396, 1e-05
  %v2411 = vadd.f32 %v2397, 1e-05
  %v2412 = vadd.f32 %v2398, 1e-05
  %v2413 = vadd.f32 %v2399, 1e-05
  %v2414 = vrsqrt.pop %v2400
  %v2415 = vrsqrt.pop %v2401
  %v2416 = vrsqrt.pop %v2402
  %v2417 = vrsqrt.pop %v2403
  %v2418 = vrsqrt.pop %v2404
  %v2419 = vrsqrt.pop %v2405
  %v2420 = vrsqrt.pop %v2406
  %v2421 = vrsqrt.pop %v2407
  %v2422 = vrsqrt.pop %v2408
  %v2423 = vrsqrt.pop %v2409
  %v2424 = vrsqrt.pop %v2410
  %v2425 = vrsqrt.pop %v2411
  %v2426 = vrsqrt.pop %v2412
  %v2427 = vrsqrt.pop %v2413
  %v2428 = vsub.f32 %v2217, %v2274
  %v2429 = vsub.f32 %v2218, %v2275
  %v2430 = vsub.f32 %v2219, %v2276
  %v2431 = vsub.f32 %v2220, %v2277
  %v2432 = vsub.f32 %v2221, %v2278
  %v2433 = vsub.f32 %v2222, %v2279
  %v2434 = vsub.f32 %v2223, %v2280
  %v2435 = vsub.f32 %v2224, %v2281
  %v2436 = vsub.f32 %v2225, %v2282
  %v2437 = vsub.f32 %v2226, %v2283
  %v2438 = vsub.f32 %v2227, %v2284
  %v2439 = vsub.f32 %v2228, %v2285
  %v2440 = vsub.f32 %v2229, %v2286
  %v2441 = vsub.f32 %v2230, %v2287
  %v2442 = vmul.f32 %v2428, %v2414
  %v2443 = vmul.f32 %v2429, %v2415
  %v2444 = vmul.f32 %v2430, %v2416
  %v2445 = vmul.f32 %v2431, %v2417
  %v2446 = vmul.f32 %v2432, %v2418
  %v2447 = vmul.f32 %v2433, %v2419
  %v2448 = vmul.f32 %v2434, %v2420
  %v2449 = vmul.f32 %v2435, %v2421
  %v2450 = vmul.f32 %v2436, %v2422
  %v2451 = vmul.f32 %v2437, %v2423
  %v2452 = vmul.f32 %v2438, %v2424
  %v2453 = vmul.f32 %v2439, %v2425
  %v2454 = vmul.f32 %v2440, %v2426
  %v2455 = vmul.f32 %v2441, %v2427
  %v2456 = vpack.c.bf16 %v2443, %v2442
  %v2457 = vpack.c.bf16 %v2445, %v2444
  %v2458 = vpack.c.bf16 %v2447, %v2446
  %v2459 = vpack.c.bf16 %v2449, %v2448
  %v2460 = vpack.c.bf16 %v2451, %v2450
  %v2461 = vpack.c.bf16 %v2453, %v2452
  %v2462 = vpack.c.bf16 %v2455, %v2454
  %v2463 = vld [vmem:[%s5] sm:$0xf]
  %v2464 = vld [vmem:[%s5 + $0x4] sm:$0xf]
  %v2465 = vld [vmem:[%s5 + $0x8] sm:$0xf]
  %v2466 = vld [vmem:[%s5 + $0xc] sm:$0xf]
  %v2467 = vld [vmem:[%s5 + $0x10] sm:$0xf]
  %v2468 = vld [vmem:[%s5 + $0x14] sm:$0xf]
  %v2469 = vld [vmem:[%s5 + $0x18] sm:$0xf]
  %2470 = vset.pattern.permute.xlu0 3
  %2471 = vperm.xlu0 %2470, %v30
  %v2472 = vpop.permute.xlu0 %2471
  %2474 = vset.pattern.permute.xlu0 3
  %2475 = vperm.xlu0 %2474, %v31
  %v2476 = vpop.permute.xlu0 %2475
  %2478 = vset.pattern.permute.xlu0 3
  %2479 = vperm.xlu0 %2478, %v32
  %v2480 = vpop.permute.xlu0 %2479
  %2482 = vset.pattern.permute.xlu0 3
  %2483 = vperm.xlu0 %2482, %v33
  %v2484 = vpop.permute.xlu0 %2483
  %2486 = vset.pattern.permute.xlu0 3
  %2487 = vperm.xlu0 %2486, %v34
  %v2488 = vpop.permute.xlu0 %2487
  %2490 = vset.pattern.permute.xlu0 3
  %2491 = vperm.xlu0 %2490, %v35
  %v2492 = vpop.permute.xlu0 %2491
  %2494 = vset.pattern.permute.xlu0 3
  %2495 = vperm.xlu0 %2494, %v36
  %v2496 = vpop.permute.xlu0 %2495
  %v2505 = vunpack.c.l.b16 %v2463
  %v2506 = vunpack.c.l.b16 %v2464
  %v2507 = vunpack.c.l.b16 %v2465
  %v2508 = vunpack.c.l.b16 %v2466
  %v2509 = vunpack.c.l.b16 %v2467
  %v2510 = vunpack.c.l.b16 %v2468
  %v2511 = vunpack.c.l.b16 %v2469
  %v2512 = vpack.c.b16 %v2506, %v2505
  %v2513 = vpack.c.b16 %v2508, %v2507
  %v2514 = vpack.c.b16 %v2510, %v2509
  %v2515 = vpack.c.b16 %v2511, %v2511
  %vm2516 = vcmask 916480
  %v2518 = vsel %vm2516, %v2512, 0
  %v2521 = vsel %vm2516, %v2513, 0
  %v2524 = vsel %vm2516, %v2514, 0
  %v2527 = vsel %vm2516, %v2515, 0
  %2529 = vmatprep.subr.bf16.mxu0 0
  %2530 = vmatpush1.bf16.msra.mxu0 0
  %2531 = vmatprep.subr.bf16.mxu0 0
  %2532 = vmatpush1.bf16.msra.mxu0 %v2462
  %2533 = vmatprep.subr.bf16.mxu0 0
  %2534 = vmatpush1.bf16.msra.mxu0 %v2461
  %2535 = vmatprep.subr.bf16.mxu0 0
  %2536 = vmatpush1.bf16.msra.mxu0 %v2460
  %2537 = vmatprep.subr.bf16.mxu0 0
  %2538 = vmatpush1.bf16.msra.mxu0 %v2459
  %2539 = vmatprep.subr.bf16.mxu0 0
  %2540 = vmatpush1.bf16.msra.mxu0 %v2458
  %2541 = vmatprep.subr.bf16.mxu0 0
  %2542 = vmatpush1.bf16.msra.mxu0 %v2457
  %2543 = vmatprep.subr.bf16.mxu0 0
  %2544 = vmatpush1.bf16.msra.mxu0 %v2456
  %2545 = vmatprep.subr.bf16.mxu0 0
  %2546 = vmatpush2.bf16.msra.mxu0 0
  %2547 = vmatprep.subr.bf16.mxu0 0
  %2548 = vmatpush2.bf16.msra.mxu0 0
  %2549 = vmatprep.subr.bf16.mxu0 0
  %2550 = vmatpush2.bf16.msra.mxu0 0
  %2551 = vmatprep.subr.bf16.mxu0 0
  %2552 = vmatpush2.bf16.msra.mxu0 0
  %2553 = vmatprep.subr.bf16.mxu0 0
  %2554 = vmatpush2.bf16.msra.mxu0 0
  %2555 = vmatprep.subr.bf16.mxu0 0
  %2556 = vmatpush2.bf16.msra.mxu0 0
  %2557 = vmatprep.subr.bf16.mxu0 0
  %2558 = vmatpush2.bf16.msra.mxu0 0
  %2559 = vmatprep.subr.bf16.mxu0 0
  %2560 = vmatpush2.bf16.msra.mxu0 0
  %2561 = vmatprep.mubr.bf16.mxu0 0
  %2562 = vmatmul.mubr.bf16.gmra.mxu0 %v2518
  %v2563 = vpop.f32.mrf.mxu0
  %v2564 = vadd.f32 %v2472, %v2563
  %v2565 = vpop.f32.mrf.mxu0
  %v2566 = vpop.f32.mrf.mxu0
  %v2567 = vadd.f32 %v2476, %v2566
  %v2568 = vpop.f32.mrf.mxu0
  %2569 = vmatprep.mubr.bf16.mxu0 0
  %2570 = vmatmul.mubr.bf16.gmra.mxu0 %v2521
  %v2571 = vpop.f32.mrf.mxu0
  %v2572 = vadd.f32 %v2480, %v2571
  %v2573 = vpop.f32.mrf.mxu0
  %v2574 = vpop.f32.mrf.mxu0
  %v2575 = vadd.f32 %v2484, %v2574
  %v2576 = vpop.f32.mrf.mxu0
  %2577 = vmatprep.mubr.bf16.mxu0 0
  %2578 = vmatmul.mubr.bf16.gmra.mxu0 %v2524
  %v2579 = vpop.f32.mrf.mxu0
  %v2580 = vadd.f32 %v2488, %v2579
  %v2581 = vpop.f32.mrf.mxu0
  %v2582 = vpop.f32.mrf.mxu0
  %v2583 = vadd.f32 %v2492, %v2582
  %v2584 = vpop.f32.mrf.mxu0
  %2585 = vmatprep.mubr.bf16.mxu0 0
  %2586 = vmatmul.mubr.bf16.gmra.mxu0 %v2527
  %v2587 = vpop.f32.mrf.mxu0
  %v2588 = vadd.f32 %v2496, %v2587
  %v2589 = vpop.f32.mrf.mxu0
  %v2590 = vpop.f32.mrf.mxu0
  %v2591 = vpop.f32.mrf.mxu0
  %2592 = vdwg.mxu0
  %v2593 = vmax.f32 %v2564, 0.0
  %v2594 = vmax.f32 %v2567, 0.0
  %v2595 = vmax.f32 %v2572, 0.0
  %v2596 = vmax.f32 %v2575, 0.0
  %v2597 = vmax.f32 %v2580, 0.0
  %v2598 = vmax.f32 %v2583, 0.0
  %v2599 = vmax.f32 %v2588, 0.0
  %v2600 = vsel %vm2231, %v2593, 0.0
  %2601 = vadd.xlane.f32.xlu0 %v2600
  %v2602 = vpop.xlane.xlu0 %2601
  %v2603 = vsel %vm2231, %v2594, 0.0
  %2604 = vadd.xlane.f32.xlu0 %v2603
  %v2605 = vpop.xlane.xlu0 %2604
  %v2606 = vsel %vm2231, %v2595, 0.0
  %2607 = vadd.xlane.f32.xlu0 %v2606
  %v2608 = vpop.xlane.xlu0 %2607
  %v2609 = vsel %vm2231, %v2596, 0.0
  %2610 = vadd.xlane.f32.xlu0 %v2609
  %v2611 = vpop.xlane.xlu0 %2610
  %v2612 = vsel %vm2231, %v2597, 0.0
  %2613 = vadd.xlane.f32.xlu0 %v2612
  %v2614 = vpop.xlane.xlu0 %2613
  %v2615 = vsel %vm2231, %v2598, 0.0
  %2616 = vadd.xlane.f32.xlu0 %v2615
  %v2617 = vpop.xlane.xlu0 %2616
  %v2618 = vsel %vm2231, %v2599, 0.0
  %2619 = vadd.xlane.f32.xlu0 %v2618
  %v2620 = vpop.xlane.xlu0 %2619
  %v2621 = vmul.f32 %v2602, 0.5
  %v2622 = vmul.f32 %v2605, 0.5
  %v2623 = vmul.f32 %v2608, 0.5
  %v2624 = vmul.f32 %v2611, 0.5
  %v2625 = vmul.f32 %v2614, 0.5
  %v2626 = vmul.f32 %v2617, 0.5
  %v2627 = vmul.f32 %v2620, 0.5
  %v2628 = vmul.f32 %v2593, %v2593
  %v2629 = vmul.f32 %v2594, %v2594
  %v2630 = vmul.f32 %v2595, %v2595
  %v2631 = vmul.f32 %v2596, %v2596
  %v2632 = vmul.f32 %v2597, %v2597
  %v2633 = vmul.f32 %v2598, %v2598
  %v2634 = vmul.f32 %v2599, %v2599
  %v2635 = vsel %vm2231, %v2628, 0.0
  %2636 = vadd.xlane.f32.xlu0 %v2635
  %v2637 = vpop.xlane.xlu0 %2636
  %v2638 = vsel %vm2231, %v2629, 0.0
  %2639 = vadd.xlane.f32.xlu0 %v2638
  %v2640 = vpop.xlane.xlu0 %2639
  %v2641 = vsel %vm2231, %v2630, 0.0
  %2642 = vadd.xlane.f32.xlu0 %v2641
  %v2643 = vpop.xlane.xlu0 %2642
  %v2644 = vsel %vm2231, %v2631, 0.0
  %2645 = vadd.xlane.f32.xlu0 %v2644
  %v2646 = vpop.xlane.xlu0 %2645
  %v2647 = vsel %vm2231, %v2632, 0.0
  %2648 = vadd.xlane.f32.xlu0 %v2647
  %v2649 = vpop.xlane.xlu0 %2648
  %v2650 = vsel %vm2231, %v2633, 0.0
  %2651 = vadd.xlane.f32.xlu0 %v2650
  %v2652 = vpop.xlane.xlu0 %2651
  %v2653 = vsel %vm2231, %v2634, 0.0
  %2654 = vadd.xlane.f32.xlu0 %v2653
  %v2655 = vpop.xlane.xlu0 %2654
  %v2656 = vmul.f32 %v2637, 0.5
  %v2657 = vmul.f32 %v2640, 0.5
  %v2658 = vmul.f32 %v2643, 0.5
  %v2659 = vmul.f32 %v2646, 0.5
  %v2660 = vmul.f32 %v2649, 0.5
  %v2661 = vmul.f32 %v2652, 0.5
  %v2662 = vmul.f32 %v2655, 0.5
  %v2663 = vmul.f32 %v2621, %v2621
  %v2664 = vmul.f32 %v2622, %v2622
  %v2665 = vmul.f32 %v2623, %v2623
  %v2666 = vmul.f32 %v2624, %v2624
  %v2667 = vmul.f32 %v2625, %v2625
  %v2668 = vmul.f32 %v2626, %v2626
  %v2669 = vmul.f32 %v2627, %v2627
  %v2670 = vsub.f32 %v2656, %v2663
  %v2671 = vsub.f32 %v2657, %v2664
  %v2672 = vsub.f32 %v2658, %v2665
  %v2673 = vsub.f32 %v2659, %v2666
  %v2674 = vsub.f32 %v2660, %v2667
  %v2675 = vsub.f32 %v2661, %v2668
  %v2676 = vsub.f32 %v2662, %v2669
  %v2677 = vmax.f32 %v2670, 0.0
  %v2678 = vmax.f32 %v2671, 0.0
  %v2679 = vmax.f32 %v2672, 0.0
  %v2680 = vmax.f32 %v2673, 0.0
  %v2681 = vmax.f32 %v2674, 0.0
  %v2682 = vmax.f32 %v2675, 0.0
  %v2683 = vmax.f32 %v2676, 0.0
  %v2684 = vadd.f32 %v2677, 1e-05
  %v2685 = vadd.f32 %v2678, 1e-05
  %v2686 = vadd.f32 %v2679, 1e-05
  %v2687 = vadd.f32 %v2680, 1e-05
  %v2688 = vadd.f32 %v2681, 1e-05
  %v2689 = vadd.f32 %v2682, 1e-05
  %v2690 = vadd.f32 %v2683, 1e-05
  %v2691 = vrsqrt.pop %v2684
  %v2692 = vrsqrt.pop %v2685
  %v2693 = vrsqrt.pop %v2686
  %v2694 = vrsqrt.pop %v2687
  %v2695 = vrsqrt.pop %v2688
  %v2696 = vrsqrt.pop %v2689
  %v2697 = vrsqrt.pop %v2690
  %v2698 = vsub.f32 %v2593, %v2621
  %v2699 = vsub.f32 %v2594, %v2622
  %v2700 = vsub.f32 %v2595, %v2623
  %v2701 = vsub.f32 %v2596, %v2624
  %v2702 = vsub.f32 %v2597, %v2625
  %v2703 = vsub.f32 %v2598, %v2626
  %v2704 = vsub.f32 %v2599, %v2627
  %v2705 = vmul.f32 %v2698, %v2691
  %v2706 = vmul.f32 %v2699, %v2692
  %v2707 = vmul.f32 %v2700, %v2693
  %v2708 = vmul.f32 %v2701, %v2694
  %v2709 = vmul.f32 %v2702, %v2695
  %v2710 = vmul.f32 %v2703, %v2696
  %v2711 = vmul.f32 %v2704, %v2697
  %v2712 = vpack.c.bf16 %v2706, %v2705
  %v2713 = vpack.c.bf16 %v2708, %v2707
  %v2714 = vpack.c.bf16 %v2710, %v2709
  %v2715 = vpack.c.bf16 %v2711, %v2711
  %v2716 = vld [vmem:[%s6] sm:$0xf]
  %2718 = vset.pattern.permute.xlu0 4
  %2719 = vperm.xlu0 %2718, %v44
  %v2720 = vpop.permute.xlu0 %2719
  %vm2722 = vcmask 457728
  %v2724 = vsel %vm2722, %v2716, 0
  %v2727 = vsel %vm894, %v2715, 0
  %2729 = vmatprep.subr.bf16.mxu0 0
  %2730 = vmatpush1.bf16.msra.mxu0 0
  %2731 = vmatprep.subr.bf16.mxu0 0
  %2732 = vmatpush1.bf16.msra.mxu0 0
  %2733 = vmatprep.subr.bf16.mxu0 0
  %2734 = vmatpush1.bf16.msra.mxu0 0
  %2735 = vmatprep.subr.bf16.mxu0 0
  %2736 = vmatpush1.bf16.msra.mxu0 0
  %2737 = vmatprep.subr.bf16.mxu0 0
  %2738 = vmatpush1.bf16.msra.mxu0 %v2727
  %2739 = vmatprep.subr.bf16.mxu0 0
  %2740 = vmatpush1.bf16.msra.mxu0 %v2714
  %2741 = vmatprep.subr.bf16.mxu0 0
  %2742 = vmatpush1.bf16.msra.mxu0 %v2713
  %2743 = vmatprep.subr.bf16.mxu0 0
  %2744 = vmatpush1.bf16.msra.mxu0 %v2712
  %2745 = vmatprep.subr.bf16.mxu0 0
  %2746 = vmatpush2.bf16.msra.mxu0 0
  %2747 = vmatprep.subr.bf16.mxu0 0
  %2748 = vmatpush2.bf16.msra.mxu0 0
  %2749 = vmatprep.subr.bf16.mxu0 0
  %2750 = vmatpush2.bf16.msra.mxu0 0
  %2751 = vmatprep.subr.bf16.mxu0 0
  %2752 = vmatpush2.bf16.msra.mxu0 0
  %2753 = vmatprep.subr.bf16.mxu0 0
  %2754 = vmatpush2.bf16.msra.mxu0 0
  %2755 = vmatprep.subr.bf16.mxu0 0
  %2756 = vmatpush2.bf16.msra.mxu0 0
  %2757 = vmatprep.subr.bf16.mxu0 0
  %2758 = vmatpush2.bf16.msra.mxu0 0
  %2759 = vmatprep.subr.bf16.mxu0 0
  %2760 = vmatpush2.bf16.msra.mxu0 0
  %2761 = vmatprep.mubr.bf16.mxu0 0
  %2762 = vmatmul.mubr.bf16.gmra.mxu0 %v2724
  %v2763 = vpop.f32.mrf.mxu0
  %v2764 = vadd.f32 %v2720, %v2763
  %v2765 = vpop.f32.mrf.mxu0
  %v2766 = vpop.f32.mrf.mxu0
  %v2767 = vpop.f32.mrf.mxu0
  %2768 = vdwg.mxu0
  %vm2769 = vcmp.gt.f32.partialorder %v44, 0.5
  %v2770 = vxor.u32 %v2764, 2147483648
  %v2771 = vmul.f32 %v2770, 1.442695
  %v2772 = vpow.pop %v2771
  %v2773 = vadd.f32 %v2772, 1.0
  %v2774 = vrcp.pop %v2773
  %v2775 = vmul.f32 1.0, %v2774
  %v2776 = vsel %vm2769, 1, 0
  %2777 = vset.pattern.permute.xlu0 5
  %2778 = vperm.xlu0 %2777, %v2776
  %v2779 = vpop.permute.xlu0 %2778
  %vm2780 = vcmp.eq.s32.totalorder %v2779, 1
  %v2781 = vsel %vm2780, %v2775, %v2764
  %vm2782 = vcmask 14336
  %2783 = vst.msk [vmem:[%s8] sm:$0x7f] %vm2782, %v2781
  // Predicated region
  $region34: #{forward.1} parent=0 // pred_check
    _
  $region35: #{forward.1} parent=0 // pred_check_branch
    %2785 = sbr.rel (0) target = $region37
  $region36: #{forward.1} parent=0 // pred_region
    _
  $region37: #{forward.1} parent=0 // pred_fallthru
    _
  // Predicated region
  $region38: #{forward.1} parent=0 // pred_check
    _
  $region39: #{forward.1} parent=0 // pred_check_branch
    %2787 = sbr.rel (0) target = $region41
  $region40: #{forward.1} parent=0 // pred_region
    _
  $region41: #{forward.1} parent=0 // pred_fallthru
    _

</llo_original>
